<compile_context>
chip_gen: v6e
topology: v6e:2x2x1
jax: 0.10.0
libtpu: 0.0.40
codegen_flags: <defaults>
</compile_context>

<pallas_src>
import functools
import numpy as np
import jax
import jax.numpy as jnp
from jax import lax
from jax.experimental import pallas as pl
from jax.experimental.pallas import tpu as pltpu

NEG_MASK = -1e30  # large finite negative; avoids inf-inf NaN risk vs -inf


# ---------------------------------------------------------------------------
# Host-side helpers (match the PyTorch module's helpers)
# ---------------------------------------------------------------------------
def position_encoding_table(seq_len, dim_model):
    # Faithfully reproduces the reference formula:
    #   pe[i]   = sin(pos / 10000 ** (2*i/dim_model))
    #   pe[i+1] = cos(pos / 10000 ** (2*i/dim_model))   for i = 0, 2, 4, ...
    pe = np.zeros((seq_len, dim_model), dtype=np.float64)
    for pos in range(seq_len):
        for i in range(0, dim_model, 2):
            pe[pos, i] = np.sin(pos / 10000 ** (2 * i / dim_model))
            pe[pos, i + 1] = np.cos(pos / 10000 ** (2 * i / dim_model))
    return jnp.asarray(pe, dtype=jnp.float32)


def build_causal_additive_mask(seq_len):
    """(S,S) causal mask in additive form: 0 where allowed, NEG_MASK otherwise."""
    i = np.arange(seq_len)[:, None]
    j = np.arange(seq_len)[None, :]
    return jnp.asarray(np.where(j <= i, 0.0, NEG_MASK), dtype=jnp.float32)


def pack_params(params, emb_table, n_heads, seq_len):
    """Pack all per-layer tensors into 3 slabs; fold the 1/sqrt(hd) scale into Q."""
    E = params["wq1"].shape[0]
    S = seq_len
    scale = 1.0 / np.sqrt(E // n_heads)
    w3 = 3 * E

    # bf16 MXU-operand slabs
    wide = jnp.concatenate(                                      # (E, 5E)
        [params["wq1"] * scale, params["wk1"], params["wv1"],
         params["wk2"], params["wv2"]], axis=1).astype(jnp.bfloat16)
    tall = jnp.concatenate(                                      # (5E, E)
        [params["wo1"], params["wq2"] * scale, params["wo2"],
         params["fw1"], params["fw2"]], axis=0).astype(jnp.bfloat16)

    def pad_cols(m):
        m = jnp.asarray(m, jnp.float32)
        return jnp.pad(m, ((0, 0), (0, w3 - m.shape[1])))

    bias_rows = jnp.concatenate([                                # (11, 3E)
        pad_cols(jnp.concatenate([params["bq1"] * scale, params["bk1"],
                                  params["bv1"]], axis=1)),      # 0: fused qkv1 bias
        pad_cols(jnp.concatenate([params["bk2"], params["bv2"]], axis=1)),  # 1
        pad_cols(params["bq2"] * scale),                         # 2
        pad_cols(params["bo1"]), pad_cols(params["bo2"]),        # 3, 4
        pad_cols(params["fb1"]), pad_cols(params["fb2"]),        # 5, 6
        pad_cols(params["ln1w"]), pad_cols(params["ln1b"]),      # 7, 8
        pad_cols(params["ln3w"]), pad_cols(params["ln3b"]),      # 9, 10
    ], axis=0)

    pe = pad_cols(position_encoding_table(S, E))                 # (S, 3E)
    mask = pad_cols(build_causal_additive_mask(S))               # (S, 3E) (mask in cols 0:S)
    emb = pad_cols(emb_table)                                    # (total_in, 3E), kept f32
                                                                 # (exact one-hot gather)
    misc = jnp.concatenate([bias_rows, pe, mask, emb], axis=0)   # (11+2S+total_in, 3E) f32
    return wide, tall, misc


# ---------------------------------------------------------------------------
# Pallas kernel: full decoder block forward for ONE batch element per grid step
# ---------------------------------------------------------------------------
def _layer_norm(v, w, b, eps=1e-5):
    mu = jnp.mean(v, axis=-1, keepdims=True)
    var = jnp.mean((v - mu) ** 2, axis=-1, keepdims=True)
    return (v - mu) * lax.rsqrt(var + eps) * w + b


def decoder_block_kernel(ids_ref, enc_ref, wide_ref, tall_ref, misc_ref,
                         out_ref, ctx_scr, *, n_heads, total_in):
    _, S, E = out_ref.shape
    hd = E // n_heads

    ids = ids_ref[0]            # (S, 1) int32 token ids for this batch element
    enc = enc_ref[0]            # (S, E) bf16 encoder output (cross-attn K/V source)

    # ---- static slices of the packed bf16 weight slabs ----
    wqkv1 = wide_ref[:, 0:3 * E]           # (E, 3E)  [wq1*scale | wk1 | wv1]
    wkv2 = wide_ref[:, 3 * E:5 * E]        # (E, 2E)  [wk2 | wv2]
    wo1 = tall_ref[0 * E:1 * E, :]
    wq2 = tall_ref[1 * E:2 * E, :]         # pre-scaled by 1/sqrt(hd)
    wo2 = tall_ref[2 * E:3 * E, :]
    fw1 = tall_ref[3 * E:4 * E, :]
    fw2 = tall_ref[4 * E:5 * E, :]

    # ---- f32 misc slab: biases / LayerNorm / PE / mask / embedding table ----
    bqkv1 = misc_ref[0:1, :]
    bkv2 = misc_ref[1:2, 0:2 * E]
    bq2 = misc_ref[2:3, 0:E]
    bo1 = misc_ref[3:4, 0:E]
    bo2 = misc_ref[4:5, 0:E]
    fb1 = misc_ref[5:6, 0:E]
    fb2 = misc_ref[6:7, 0:E]
    ln1w = misc_ref[7:8, 0:E]
    ln1b = misc_ref[8:9, 0:E]
    ln3w = misc_ref[9:10, 0:E]
    ln3b = misc_ref[10:11, 0:E]
    pe = misc_ref[11:11 + S, 0:E]                              # (S, E)
    mask_add = misc_ref[11 + S:11 + 2 * S, 0:S]                # (S, S) additive causal
    emb = misc_ref[11 + 2 * S:11 + 2 * S + total_in, 0:E]      # (total_in, E) f32

    # ---- fused embedding gather (one-hot matmul, exact in f32) + positional ----
    onehot = (lax.broadcasted_iota(jnp.int32, (S, total_in), 1) == ids
              ).astype(jnp.float32)
    x = jnp.dot(onehot, emb, preferred_element_type=jnp.float32) + pe      # (S, E) f32

    def attend(q, k, v, wo_b16, bo):
        # q/k/v: (S, E) f32; Q pre-scaled (folded on the host).
        # Each head's context is written to a lane slice of the VMEM scratch,
        # then ONE fused (S,E)@(E,E) output projection runs on the MXU.
        qb = q.astype(jnp.bfloat16)
        kb = k.astype(jnp.bfloat16)
        vb = v.astype(jnp.bfloat16)
        for h in range(n_heads):                      # small static unroll
            lo, hi = h * hd, (h + 1) * hd
            s = lax.dot_general(qb[:, lo:hi], kb[:, lo:hi],
                                (((1,), (1,)), ((), ())),
                                preferred_element_type=jnp.float32)        # (S, S)
            s = s + mask_add
            # hand-rolled softmax: divide replaced by approx reciprocal (EUP slot)
            m = jnp.max(s, axis=-1, keepdims=True)
            p = jnp.exp(s - m)
            p = p * pl.reciprocal(jnp.sum(p, axis=-1, keepdims=True), approx=True)
            ctx_scr[:, lo:hi] = jnp.dot(p.astype(jnp.bfloat16), vb[:, lo:hi],
                                        preferred_element_type=jnp.float32)
        return jnp.dot(ctx_scr[...].astype(jnp.bfloat16), wo_b16,
                       preferred_element_type=jnp.float32) + bo

    # ---- block 1: fused-QKV masked self-attention + skip + LayerNorm1 ----
    qkv1 = jnp.dot(x.astype(jnp.bfloat16), wqkv1,
                   preferred_element_type=jnp.float32) + bqkv1             # (S, 3E)
    attn1 = attend(qkv1[:, 0:E], qkv1[:, E:2 * E], qkv1[:, 2 * E:3 * E], wo1, bo1)
    out1 = _layer_norm(x + attn1, ln1w, ln1b)

    # ---- block 2: masked cross-attention (fused KV projection) + skip ----
    q2 = jnp.dot(out1.astype(jnp.bfloat16), wq2,
                 preferred_element_type=jnp.float32) + bq2                 # (S, E)
    kv2 = jnp.dot(enc, wkv2, preferred_element_type=jnp.float32) + bkv2    # (S, 2E)
    attn2 = attend(q2, kv2[:, 0:E], kv2[:, E:2 * E], wo2, bo2)
    out2 = out1 + attn2
    # (reference computes layer_norm2(en_out) but never uses it -> dead code, omitted)

    # ---- block 3: FFN + skip + LayerNorm3 ----
    h1 = jnp.maximum(
        jnp.dot(out2.astype(jnp.bfloat16), fw1,
                preferred_element_type=jnp.float32) + fb1, 0.0)
    ffn = jnp.dot(h1.astype(jnp.bfloat16), fw2,
                  preferred_element_type=jnp.float32) + fb2
    # NOTE: E=32 -> masked partial store; negligible at this size (lane-dense
    # output only matters once the fused kernel's outputs grow).
    out_ref[0] = _layer_norm(out2 + ffn, ln3w, ln3b).astype(out_ref.dtype)


# ---------------------------------------------------------------------------
# Wrapper
# ---------------------------------------------------------------------------
def decoder_block_pallas(ids, enc, packed, n_heads, total_in):
    bs, S = ids.shape
    wide, tall, misc = packed
    E = wide.shape[0]

    ids3 = ids.reshape(bs, S, 1).astype(jnp.int32)
    enc_b16 = enc.astype(jnp.bfloat16)     # enc only feeds bf16 matmuls (K/V proj)

    # Advisory cost estimate so XLA schedules the surrounding ops sensibly.
    flops = bs * (
        2 * S * total_in * E                       # embedding one-hot gather
        + 2 * S * E * 3 * E                        # fused QKV projection
        + 2 * (4 * S * S * E + 2 * S * E * E)      # 2 attention blocks (scores+PV+out)
        + 2 * S * E * E + 2 * S * E * 2 * E        # q2 + fused kv2 projections
        + 2 * (2 * S * E * E))                     # FFN
    transcendentals = bs * (2 * n_heads * S * S + 8 * S)
    bytes_accessed = (ids3.size * 4 + enc_b16.size * 2 + wide.size * 2
                      + tall.size * 2 + misc.size * 4 + bs * S * E * 4)

    out = pl.pallas_call(
        functools.partial(decoder_block_kernel, n_heads=n_heads, total_in=total_in),
        out_shape=jax.ShapeDtypeStruct((bs, S, E), jnp.float32),
        grid=(bs,),
        in_specs=[
            pl.BlockSpec((1, S, 1), lambda b: (b, 0, 0)),      # token ids
            pl.BlockSpec((1, S, E), lambda b: (b, 0, 0)),      # encoder output (bf16)
            pl.BlockSpec(wide.shape, lambda b: (0, 0)),        # (E,5E) slab, DMA'd once
            pl.BlockSpec(tall.shape, lambda b: (0, 0)),        # (5E,E) slab, DMA'd once
            pl.BlockSpec(misc.shape, lambda b: (0, 0)),        # f32 misc slab, DMA'd once
        ],
        out_specs=pl.BlockSpec((1, S, E), lambda b: (b, 0, 0)),
        scratch_shapes=[pltpu.VMEM((S, E), jnp.float32)],      # per-head ctx staging
        compiler_params=pltpu.CompilerParams(
            dimension_semantics=("parallel",)),                # batch across TCs (v7x)
        cost_estimate=pl.CostEstimate(flops=flops,
                                      transcendentals=transcendentals,
                                      bytes_accessed=bytes_accessed),
    )(ids3, enc_b16, wide, tall, misc)
    return out


# ---------------------------------------------------------------------------
# Pure-JAX reference (for correctness check)
# ---------------------------------------------------------------------------
def decoder_block_ref(ids, enc, p, emb_table, n_heads):
    B, S = ids.shape
    E = emb_table.shape[1]
    hd = E // n_heads
    pe = position_encoding_table(S, E)
    x = jnp.take(emb_table, ids, axis=0) + pe[None]
    mask = np.triu(np.ones((S, S), dtype=bool), k=1)

    def mha(q_in, k_in, v_in, wq, wk, wv, bq, bk, bv, wo, bo):
        q = q_in @ wq + bq
        k = k_in @ wk + bk
        v = v_in @ wv + bv
        q = q.reshape(B, S, n_heads, hd).transpose(0, 2, 1, 3)
        k = k.reshape(B, S, n_heads, hd).transpose(0, 2, 1, 3)
        v = v.reshape(B, S, n_heads, hd).transpose(0, 2, 1, 3)
        s = jnp.einsum("bhqd,bhkd->bhqk", q, k) / np.sqrt(hd)
        s = jnp.where(mask, -jnp.inf, s)
        a = jax.nn.softmax(s, axis=-1)
        ctx = jnp.einsum("bhqk,bhkd->bhqd", a, v).transpose(0, 2, 1, 3).reshape(B, S, E)
        return ctx @ wo + bo

    def ln(v, w, b, eps=1e-5):
        mu = jnp.mean(v, axis=-1, keepdims=True)
        var = jnp.mean((v - mu) ** 2, axis=-1, keepdims=True)
        return (v - mu) / jnp.sqrt(var + eps) * w + b

    out = x
    attn1 = mha(out, out, out, p["wq1"], p["wk1"], p["wv1"],
                p["bq1"], p["bk1"], p["bv1"], p["wo1"], p["bo1"])
    out = ln(out + attn1, p["ln1w"], p["ln1b"])
    attn2 = mha(out, enc, enc, p["wq2"], p["wk2"], p["wv2"],
                p["bq2"], p["bk2"], p["bv2"], p["wo2"], p["bo2"])
    out = out + attn2
    h1 = jax.nn.relu(out @ p["fw1"] + p["fb1"])
    ffn = h1 @ p["fw2"] + p["fb2"]
    out = ln(out + ffn, p["ln3w"], p["ln3b"])
    return out


# ---------------------------------------------------------------------------
# Main
# ---------------------------------------------------------------------------
if __name__ == "__main__":
    # Model hyperparameters (small, consistent with the module)
    bs, seq_len, dim_model, heads_de, total_in = 2, 8, 32, 4, 50

    key = jax.random.PRNGKey(0)
    keys = jax.random.split(key, 20)

    def w(k, shape, scale=0.05):
        return jax.random.normal(k, shape, dtype=jnp.float32) * scale

    E = dim_model
    params = {
        # attention 1 (weights stored pre-transposed as (in, out))
        "wq1": w(keys[0], (E, E)), "wk1": w(keys[1], (E, E)), "wv1": w(keys[2], (E, E)),
        "bq1": jnp.zeros((1, E), jnp.float32),
        "bk1": jnp.zeros((1, E), jnp.float32),
        "bv1": jnp.zeros((1, E), jnp.float32),
        "wo1": w(keys[3], (E, E)), "bo1": jnp.zeros((1, E), jnp.float32),
        # attention 2
        "wq2": w(keys[4], (E, E)), "wk2": w(keys[5], (E, E)), "wv2": w(keys[6], (E, E)),
        "bq2": jnp.zeros((1, E), jnp.float32),
        "bk2": jnp.zeros((1, E), jnp.float32),
        "bv2": jnp.zeros((1, E), jnp.float32),
        "wo2": w(keys[7], (E, E)), "bo2": jnp.zeros((1, E), jnp.float32),
        # layer norms
        "ln1w": jnp.ones((1, E), jnp.float32), "ln1b": jnp.zeros((1, E), jnp.float32),
        "ln3w": jnp.ones((1, E), jnp.float32), "ln3b": jnp.zeros((1, E), jnp.float32),
        # FFN
        "fw1": w(keys[8], (E, E)), "fb1": w(keys[9], (1, E), 0.01),
        "fw2": w(keys[10], (E, E)), "fb2": w(keys[11], (1, E), 0.01),
    }
    embed_table = w(keys[12], (total_in, E), 1.0)   # nn.Embedding weight (kept f32)

    # Example inputs (first_block=True path: token ids go straight into the kernel)
    in_in = jax.random.randint(keys[13], (bs, seq_len), 0, total_in)
    en_out = jax.random.normal(keys[14], (bs, seq_len, dim_model), jnp.float32)

    packed = pack_params(params, embed_table, heads_de, seq_len)

    out = decoder_block_pallas(in_in, en_out, packed, heads_de, total_in)
    out = jax.block_until_ready(out)

    ref = decoder_block_ref(in_in, en_out, params, embed_table, heads_de)
    # bf16 MXU operands (with f32 accumulation / f32 element-wise) introduce a
    # small relative error vs the pure-f32 reference; 1e-2 gives ample margin.
    np.testing.assert_allclose(np.asarray(out), np.asarray(ref), rtol=1e-2, atol=1e-2)

    print("KERNEL_OK")
</pallas_src>

<mosaic_0001>
module attributes {stable_mosaic.version = 11 : i64} {
  func.func @decoder_block_kernel(%arg0: i32, %arg1: memref<1x8x1xi32, #tpu.memory_space<vmem>>, %arg2: memref<1x8x32xbf16, #tpu.memory_space<vmem>>, %arg3: memref<32x160xbf16, #tpu.memory_space<vmem>>, %arg4: memref<160x32xbf16, #tpu.memory_space<vmem>>, %arg5: memref<77x96xf32, #tpu.memory_space<vmem>>, %arg6: memref<1x8x32xf32, #tpu.memory_space<vmem>>, %arg7: memref<8x32xf32, #tpu.memory_space<vmem>>) attributes {dimension_semantics = [#tpu.dimension_semantics<parallel>], iteration_bounds = array<i64: 2>, scalar_prefetch = 0 : i64, scratch_operands = 1 : i64, tpu.core_type = #tpu.core_type<tc>, window_params = [{transform_indices = @transform_0, window_bounds = array<i64: 1, 8, 1>}, {transform_indices = @transform_1, window_bounds = array<i64: 1, 8, 32>}, {pipeline_mode = #tpu.pipeline_mode<synchronous>, transform_indices = @transform_2, window_bounds = array<i64: 32, 160>}, {pipeline_mode = #tpu.pipeline_mode<synchronous>, transform_indices = @transform_3, window_bounds = array<i64: 160, 32>}, {pipeline_mode = #tpu.pipeline_mode<synchronous>, transform_indices = @transform_4, window_bounds = array<i64: 77, 96>}, {transform_indices = @transform_5, window_bounds = array<i64: 1, 8, 32>}]} {
    %c0 = arith.constant 0 : index
    %c0_0 = arith.constant 0 : index
    %c0_1 = arith.constant 0 : index
    %0 = vector.load %arg1[%c0, %c0_0, %c0_1] : memref<1x8x1xi32, #tpu.memory_space<vmem>>, vector<1x8x1xi32>
    %1 = vector.shape_cast %0 : vector<1x8x1xi32> to vector<8x1xi32>
    %c0_2 = arith.constant 0 : index
    %c0_3 = arith.constant 0 : index
    %c0_4 = arith.constant 0 : index
    %2 = vector.load %arg2[%c0_2, %c0_3, %c0_4] : memref<1x8x32xbf16, #tpu.memory_space<vmem>>, vector<1x8x32xbf16>
    %3 = vector.shape_cast %2 : vector<1x8x32xbf16> to vector<8x32xbf16>
    %c0_5 = arith.constant 0 : index
    %c0_6 = arith.constant 0 : index
    %4 = vector.load %arg3[%c0_5, %c0_6] : memref<32x160xbf16, #tpu.memory_space<vmem>>, vector<32x96xbf16>
    %c0_7 = arith.constant 0 : index
    %c96 = arith.constant 96 : index
    %5 = vector.load %arg3[%c0_7, %c96] : memref<32x160xbf16, #tpu.memory_space<vmem>>, vector<32x64xbf16>
    %c0_8 = arith.constant 0 : index
    %c0_9 = arith.constant 0 : index
    %6 = vector.load %arg4[%c0_8, %c0_9] : memref<160x32xbf16, #tpu.memory_space<vmem>>, vector<32x32xbf16>
    %c32 = arith.constant 32 : index
    %c0_10 = arith.constant 0 : index
    %7 = vector.load %arg4[%c32, %c0_10] : memref<160x32xbf16, #tpu.memory_space<vmem>>, vector<32x32xbf16>
    %c64 = arith.constant 64 : index
    %c0_11 = arith.constant 0 : index
    %8 = vector.load %arg4[%c64, %c0_11] : memref<160x32xbf16, #tpu.memory_space<vmem>>, vector<32x32xbf16>
    %c96_12 = arith.constant 96 : index
    %c0_13 = arith.constant 0 : index
    %9 = vector.load %arg4[%c96_12, %c0_13] : memref<160x32xbf16, #tpu.memory_space<vmem>>, vector<32x32xbf16>
    %c128 = arith.constant 128 : index
    %c0_14 = arith.constant 0 : index
    %10 = vector.load %arg4[%c128, %c0_14] : memref<160x32xbf16, #tpu.memory_space<vmem>>, vector<32x32xbf16>
    %c0_15 = arith.constant 0 : index
    %c0_16 = arith.constant 0 : index
    %11 = vector.load %arg5[%c0_15, %c0_16] : memref<77x96xf32, #tpu.memory_space<vmem>>, vector<1x96xf32>
    %c1 = arith.constant 1 : index
    %c0_17 = arith.constant 0 : index
    %12 = vector.load %arg5[%c1, %c0_17] : memref<77x96xf32, #tpu.memory_space<vmem>>, vector<1x64xf32>
    %c2 = arith.constant 2 : index
    %c0_18 = arith.constant 0 : index
    %13 = vector.load %arg5[%c2, %c0_18] : memref<77x96xf32, #tpu.memory_space<vmem>>, vector<1x32xf32>
    %c3 = arith.constant 3 : index
    %c0_19 = arith.constant 0 : index
    %14 = vector.load %arg5[%c3, %c0_19] : memref<77x96xf32, #tpu.memory_space<vmem>>, vector<1x32xf32>
    %c4 = arith.constant 4 : index
    %c0_20 = arith.constant 0 : index
    %15 = vector.load %arg5[%c4, %c0_20] : memref<77x96xf32, #tpu.memory_space<vmem>>, vector<1x32xf32>
    %c5 = arith.constant 5 : index
    %c0_21 = arith.constant 0 : index
    %16 = vector.load %arg5[%c5, %c0_21] : memref<77x96xf32, #tpu.memory_space<vmem>>, vector<1x32xf32>
    %c6 = arith.constant 6 : index
    %c0_22 = arith.constant 0 : index
    %17 = vector.load %arg5[%c6, %c0_22] : memref<77x96xf32, #tpu.memory_space<vmem>>, vector<1x32xf32>
    %c7 = arith.constant 7 : index
    %c0_23 = arith.constant 0 : index
    %18 = vector.load %arg5[%c7, %c0_23] : memref<77x96xf32, #tpu.memory_space<vmem>>, vector<1x32xf32>
    %c8 = arith.constant 8 : index
    %c0_24 = arith.constant 0 : index
    %19 = vector.load %arg5[%c8, %c0_24] : memref<77x96xf32, #tpu.memory_space<vmem>>, vector<1x32xf32>
    %c9 = arith.constant 9 : index
    %c0_25 = arith.constant 0 : index
    %20 = vector.load %arg5[%c9, %c0_25] : memref<77x96xf32, #tpu.memory_space<vmem>>, vector<1x32xf32>
    %c10 = arith.constant 10 : index
    %c0_26 = arith.constant 0 : index
    %21 = vector.load %arg5[%c10, %c0_26] : memref<77x96xf32, #tpu.memory_space<vmem>>, vector<1x32xf32>
    %c11 = arith.constant 11 : index
    %c0_27 = arith.constant 0 : index
    %22 = vector.load %arg5[%c11, %c0_27] : memref<77x96xf32, #tpu.memory_space<vmem>>, vector<8x32xf32>
    %c19 = arith.constant 19 : index
    %c0_28 = arith.constant 0 : index
    %23 = vector.load %arg5[%c19, %c0_28] : memref<77x96xf32, #tpu.memory_space<vmem>>, vector<8x8xf32>
    %c27 = arith.constant 27 : index
    %c0_29 = arith.constant 0 : index
    %24 = vector.load %arg5[%c27, %c0_29] : memref<77x96xf32, #tpu.memory_space<vmem>>, vector<50x32xf32>
    %25 = tpu.iota {dimensions = array<i32: 1>} : vector<8x50xi32>
    %26 = vector.broadcast %1 : vector<8x1xi32> to vector<8x50xi32>
    %27 = arith.cmpi eq, %25, %26 : vector<8x50xi32>
    %28 = arith.extui %27 : vector<8x50xi1> to vector<8x50xi32>
    %29 = arith.sitofp %28 : vector<8x50xi32> to vector<8x50xf32>
    %cst = arith.constant dense<0.000000e+00> : vector<8x32xf32>
    %30 = tpu.matmul %29, %24, %cst {dimension_numbers = #tpu.dot_dimension_numbers<[1], [0], [0], [1], [0, 0, 1, 1], [], []>} : vector<8x50xf32>, vector<50x32xf32>, vector<8x32xf32> -> vector<8x32xf32>
    %31 = arith.addf %30, %22 : vector<8x32xf32>
    %32 = arith.truncf %31 : vector<8x32xf32> to vector<8x32xbf16>
    %cst_30 = arith.constant dense<0.000000e+00> : vector<8x96xf32>
    %33 = tpu.matmul %32, %4, %cst_30 {dimension_numbers = #tpu.dot_dimension_numbers<[1], [0], [0], [1], [0, 0, 1, 1], [], []>} : vector<8x32xbf16>, vector<32x96xbf16>, vector<8x96xf32> -> vector<8x96xf32>
    %34 = vector.broadcast %11 : vector<1x96xf32> to vector<8x96xf32>
    %35 = arith.addf %33, %34 : vector<8x96xf32>
    %36 = vector.extract_strided_slice %35 {offsets = [0, 0], sizes = [8, 32], strides = [1, 1]} : vector<8x96xf32> to vector<8x32xf32>
    %37 = vector.extract_strided_slice %35 {offsets = [0, 32], sizes = [8, 32], strides = [1, 1]} : vector<8x96xf32> to vector<8x32xf32>
    %38 = vector.extract_strided_slice %35 {offsets = [0, 64], sizes = [8, 32], strides = [1, 1]} : vector<8x96xf32> to vector<8x32xf32>
    %39 = arith.truncf %36 : vector<8x32xf32> to vector<8x32xbf16>
    %40 = arith.truncf %37 : vector<8x32xf32> to vector<8x32xbf16>
    %41 = arith.truncf %38 : vector<8x32xf32> to vector<8x32xbf16>
    %42 = vector.extract_strided_slice %39 {offsets = [0, 0], sizes = [8, 8], strides = [1, 1]} : vector<8x32xbf16> to vector<8x8xbf16>
    %43 = vector.extract_strided_slice %40 {offsets = [0, 0], sizes = [8, 8], strides = [1, 1]} : vector<8x32xbf16> to vector<8x8xbf16>
    %cst_31 = arith.constant dense<0.000000e+00> : vector<8x8xf32>
    %44 = tpu.matmul %42, %43, %cst_31 {dimension_numbers = #tpu.dot_dimension_numbers<[1], [1], [0], [0], [0, 0, 1, 0], [], []>} : vector<8x8xbf16>, vector<8x8xbf16>, vector<8x8xf32> -> vector<8x8xf32>
    %45 = arith.addf %44, %23 : vector<8x8xf32>
    %cst_32 = arith.constant dense<0xFF800000> : vector<8xf32>
    %46 = vector.multi_reduction <maximumf>, %45, %cst_32 [1] : vector<8x8xf32> to vector<8xf32>
    %47 = vector.shape_cast %46 : vector<8xf32> to vector<8x1xf32>
    %48 = vector.broadcast %47 : vector<8x1xf32> to vector<8x8xf32>
    %49 = arith.subf %45, %48 : vector<8x8xf32>
    %50 = math.exp %49 : vector<8x8xf32>
    %cst_33 = arith.constant dense<0.000000e+00> : vector<8xf32>
    %51 = vector.multi_reduction <add>, %50, %cst_33 [1] : vector<8x8xf32> to vector<8xf32>
    %52 = vector.shape_cast %51 : vector<8xf32> to vector<8x1xf32>
    %53 = tpu.reciprocal %52 {approx = true} : vector<8x1xf32> -> vector<8x1xf32>
    %54 = vector.broadcast %53 : vector<8x1xf32> to vector<8x8xf32>
    %55 = arith.mulf %50, %54 : vector<8x8xf32>
    %56 = arith.truncf %55 : vector<8x8xf32> to vector<8x8xbf16>
    %57 = vector.extract_strided_slice %41 {offsets = [0, 0], sizes = [8, 8], strides = [1, 1]} : vector<8x32xbf16> to vector<8x8xbf16>
    %cst_34 = arith.constant dense<0.000000e+00> : vector<8x8xf32>
    %58 = tpu.matmul %56, %57, %cst_34 {dimension_numbers = #tpu.dot_dimension_numbers<[1], [0], [0], [1], [0, 0, 1, 1], [], []>} : vector<8x8xbf16>, vector<8x8xbf16>, vector<8x8xf32> -> vector<8x8xf32>
    %c0_35 = arith.constant 0 : index
    %c0_36 = arith.constant 0 : index
    %59 = vector.load %arg7[%c0_35, %c0_36] : memref<8x32xf32, #tpu.memory_space<vmem>>, vector<8x8xf32>
    tpu.vector_store %arg7[%c0_35, %c0_36], %58 {strides = array<i32>} : memref<8x32xf32, #tpu.memory_space<vmem>>, vector<8x8xf32>,
    %60 = vector.extract_strided_slice %39 {offsets = [0, 8], sizes = [8, 8], strides = [1, 1]} : vector<8x32xbf16> to vector<8x8xbf16>
    %61 = vector.extract_strided_slice %40 {offsets = [0, 8], sizes = [8, 8], strides = [1, 1]} : vector<8x32xbf16> to vector<8x8xbf16>
    %cst_37 = arith.constant dense<0.000000e+00> : vector<8x8xf32>
    %62 = tpu.matmul %60, %61, %cst_37 {dimension_numbers = #tpu.dot_dimension_numbers<[1], [1], [0], [0], [0, 0, 1, 0], [], []>} : vector<8x8xbf16>, vector<8x8xbf16>, vector<8x8xf32> -> vector<8x8xf32>
    %63 = arith.addf %62, %23 : vector<8x8xf32>
    %cst_38 = arith.constant dense<0xFF800000> : vector<8xf32>
    %64 = vector.multi_reduction <maximumf>, %63, %cst_38 [1] : vector<8x8xf32> to vector<8xf32>
    %65 = vector.shape_cast %64 : vector<8xf32> to vector<8x1xf32>
    %66 = vector.broadcast %65 : vector<8x1xf32> to vector<8x8xf32>
    %67 = arith.subf %63, %66 : vector<8x8xf32>
    %68 = math.exp %67 : vector<8x8xf32>
    %cst_39 = arith.constant dense<0.000000e+00> : vector<8xf32>
    %69 = vector.multi_reduction <add>, %68, %cst_39 [1] : vector<8x8xf32> to vector<8xf32>
    %70 = vector.shape_cast %69 : vector<8xf32> to vector<8x1xf32>
    %71 = tpu.reciprocal %70 {approx = true} : vector<8x1xf32> -> vector<8x1xf32>
    %72 = vector.broadcast %71 : vector<8x1xf32> to vector<8x8xf32>
    %73 = arith.mulf %68, %72 : vector<8x8xf32>
    %74 = arith.truncf %73 : vector<8x8xf32> to vector<8x8xbf16>
    %75 = vector.extract_strided_slice %41 {offsets = [0, 8], sizes = [8, 8], strides = [1, 1]} : vector<8x32xbf16> to vector<8x8xbf16>
    %cst_40 = arith.constant dense<0.000000e+00> : vector<8x8xf32>
    %76 = tpu.matmul %74, %75, %cst_40 {dimension_numbers = #tpu.dot_dimension_numbers<[1], [0], [0], [1], [0, 0, 1, 1], [], []>} : vector<8x8xbf16>, vector<8x8xbf16>, vector<8x8xf32> -> vector<8x8xf32>
    %c0_41 = arith.constant 0 : index
    %c8_42 = arith.constant 8 : index
    %77 = vector.load %arg7[%c0_41, %c8_42] : memref<8x32xf32, #tpu.memory_space<vmem>>, vector<8x8xf32>
    tpu.vector_store %arg7[%c0_41, %c8_42], %76 {strides = array<i32>} : memref<8x32xf32, #tpu.memory_space<vmem>>, vector<8x8xf32>,
    %78 = vector.extract_strided_slice %39 {offsets = [0, 16], sizes = [8, 8], strides = [1, 1]} : vector<8x32xbf16> to vector<8x8xbf16>
    %79 = vector.extract_strided_slice %40 {offsets = [0, 16], sizes = [8, 8], strides = [1, 1]} : vector<8x32xbf16> to vector<8x8xbf16>
    %cst_43 = arith.constant dense<0.000000e+00> : vector<8x8xf32>
    %80 = tpu.matmul %78, %79, %cst_43 {dimension_numbers = #tpu.dot_dimension_numbers<[1], [1], [0], [0], [0, 0, 1, 0], [], []>} : vector<8x8xbf16>, vector<8x8xbf16>, vector<8x8xf32> -> vector<8x8xf32>
    %81 = arith.addf %80, %23 : vector<8x8xf32>
    %cst_44 = arith.constant dense<0xFF800000> : vector<8xf32>
    %82 = vector.multi_reduction <maximumf>, %81, %cst_44 [1] : vector<8x8xf32> to vector<8xf32>
    %83 = vector.shape_cast %82 : vector<8xf32> to vector<8x1xf32>
    %84 = vector.broadcast %83 : vector<8x1xf32> to vector<8x8xf32>
    %85 = arith.subf %81, %84 : vector<8x8xf32>
    %86 = math.exp %85 : vector<8x8xf32>
    %cst_45 = arith.constant dense<0.000000e+00> : vector<8xf32>
    %87 = vector.multi_reduction <add>, %86, %cst_45 [1] : vector<8x8xf32> to vector<8xf32>
    %88 = vector.shape_cast %87 : vector<8xf32> to vector<8x1xf32>
    %89 = tpu.reciprocal %88 {approx = true} : vector<8x1xf32> -> vector<8x1xf32>
    %90 = vector.broadcast %89 : vector<8x1xf32> to vector<8x8xf32>
    %91 = arith.mulf %86, %90 : vector<8x8xf32>
    %92 = arith.truncf %91 : vector<8x8xf32> to vector<8x8xbf16>
    %93 = vector.extract_strided_slice %41 {offsets = [0, 16], sizes = [8, 8], strides = [1, 1]} : vector<8x32xbf16> to vector<8x8xbf16>
    %cst_46 = arith.constant dense<0.000000e+00> : vector<8x8xf32>
    %94 = tpu.matmul %92, %93, %cst_46 {dimension_numbers = #tpu.dot_dimension_numbers<[1], [0], [0], [1], [0, 0, 1, 1], [], []>} : vector<8x8xbf16>, vector<8x8xbf16>, vector<8x8xf32> -> vector<8x8xf32>
    %c0_47 = arith.constant 0 : index
    %c16 = arith.constant 16 : index
    %95 = vector.load %arg7[%c0_47, %c16] : memref<8x32xf32, #tpu.memory_space<vmem>>, vector<8x8xf32>
    tpu.vector_store %arg7[%c0_47, %c16], %94 {strides = array<i32>} : memref<8x32xf32, #tpu.memory_space<vmem>>, vector<8x8xf32>,
    %96 = vector.extract_strided_slice %39 {offsets = [0, 24], sizes = [8, 8], strides = [1, 1]} : vector<8x32xbf16> to vector<8x8xbf16>
    %97 = vector.extract_strided_slice %40 {offsets = [0, 24], sizes = [8, 8], strides = [1, 1]} : vector<8x32xbf16> to vector<8x8xbf16>
    %cst_48 = arith.constant dense<0.000000e+00> : vector<8x8xf32>
    %98 = tpu.matmul %96, %97, %cst_48 {dimension_numbers = #tpu.dot_dimension_numbers<[1], [1], [0], [0], [0, 0, 1, 0], [], []>} : vector<8x8xbf16>, vector<8x8xbf16>, vector<8x8xf32> -> vector<8x8xf32>
    %99 = arith.addf %98, %23 : vector<8x8xf32>
    %cst_49 = arith.constant dense<0xFF800000> : vector<8xf32>
    %100 = vector.multi_reduction <maximumf>, %99, %cst_49 [1] : vector<8x8xf32> to vector<8xf32>
    %101 = vector.shape_cast %100 : vector<8xf32> to vector<8x1xf32>
    %102 = vector.broadcast %101 : vector<8x1xf32> to vector<8x8xf32>
    %103 = arith.subf %99, %102 : vector<8x8xf32>
    %104 = math.exp %103 : vector<8x8xf32>
    %cst_50 = arith.constant dense<0.000000e+00> : vector<8xf32>
    %105 = vector.multi_reduction <add>, %104, %cst_50 [1] : vector<8x8xf32> to vector<8xf32>
    %106 = vector.shape_cast %105 : vector<8xf32> to vector<8x1xf32>
    %107 = tpu.reciprocal %106 {approx = true} : vector<8x1xf32> -> vector<8x1xf32>
    %108 = vector.broadcast %107 : vector<8x1xf32> to vector<8x8xf32>
    %109 = arith.mulf %104, %108 : vector<8x8xf32>
    %110 = arith.truncf %109 : vector<8x8xf32> to vector<8x8xbf16>
    %111 = vector.extract_strided_slice %41 {offsets = [0, 24], sizes = [8, 8], strides = [1, 1]} : vector<8x32xbf16> to vector<8x8xbf16>
    %cst_51 = arith.constant dense<0.000000e+00> : vector<8x8xf32>
    %112 = tpu.matmul %110, %111, %cst_51 {dimension_numbers = #tpu.dot_dimension_numbers<[1], [0], [0], [1], [0, 0, 1, 1], [], []>} : vector<8x8xbf16>, vector<8x8xbf16>, vector<8x8xf32> -> vector<8x8xf32>
    %c0_52 = arith.constant 0 : index
    %c24 = arith.constant 24 : index
    %113 = vector.load %arg7[%c0_52, %c24] : memref<8x32xf32, #tpu.memory_space<vmem>>, vector<8x8xf32>
    tpu.vector_store %arg7[%c0_52, %c24], %112 {strides = array<i32>} : memref<8x32xf32, #tpu.memory_space<vmem>>, vector<8x8xf32>,
    %c0_53 = arith.constant 0 : index
    %c0_54 = arith.constant 0 : index
    %114 = vector.load %arg7[%c0_53, %c0_54] : memref<8x32xf32, #tpu.memory_space<vmem>>, vector<8x32xf32>
    %115 = arith.truncf %114 : vector<8x32xf32> to vector<8x32xbf16>
    %cst_55 = arith.constant dense<0.000000e+00> : vector<8x32xf32>
    %116 = tpu.matmul %115, %6, %cst_55 {dimension_numbers = #tpu.dot_dimension_numbers<[1], [0], [0], [1], [0, 0, 1, 1], [], []>} : vector<8x32xbf16>, vector<32x32xbf16>, vector<8x32xf32> -> vector<8x32xf32>
    %117 = vector.broadcast %14 : vector<1x32xf32> to vector<8x32xf32>
    %118 = arith.addf %116, %117 : vector<8x32xf32>
    %119 = arith.addf %31, %118 : vector<8x32xf32>
    %cst_56 = arith.constant dense<0.000000e+00> : vector<8xf32>
    %120 = vector.multi_reduction <add>, %119, %cst_56 [1] : vector<8x32xf32> to vector<8xf32>
    %121 = vector.shape_cast %120 : vector<8xf32> to vector<8x1xf32>
    %cst_57 = arith.constant 3.200000e+01 : f32
    %122 = vector.broadcast %cst_57 : f32 to vector<8x1xf32>
    %123 = arith.divf %121, %122 : vector<8x1xf32>
    %124 = vector.broadcast %123 : vector<8x1xf32> to vector<8x32xf32>
    %125 = arith.subf %119, %124 : vector<8x32xf32>
    %126 = arith.mulf %125, %125 : vector<8x32xf32>
    %cst_58 = arith.constant dense<0.000000e+00> : vector<8xf32>
    %127 = vector.multi_reduction <add>, %126, %cst_58 [1] : vector<8x32xf32> to vector<8xf32>
    %128 = vector.shape_cast %127 : vector<8xf32> to vector<8x1xf32>
    %cst_59 = arith.constant 3.200000e+01 : f32
    %129 = vector.broadcast %cst_59 : f32 to vector<8x1xf32>
    %130 = arith.divf %128, %129 : vector<8x1xf32>
    %131 = vector.broadcast %123 : vector<8x1xf32> to vector<8x32xf32>
    %132 = arith.subf %119, %131 : vector<8x32xf32>
    %cst_60 = arith.constant 9.99999974E-6 : f32
    %133 = vector.broadcast %cst_60 : f32 to vector<8x1xf32>
    %134 = arith.addf %130, %133 : vector<8x1xf32>
    %135 = math.rsqrt %134 : vector<8x1xf32>
    %136 = vector.broadcast %135 : vector<8x1xf32> to vector<8x32xf32>
    %137 = arith.mulf %132, %136 : vector<8x32xf32>
    %138 = vector.broadcast %18 : vector<1x32xf32> to vector<8x32xf32>
    %139 = arith.mulf %137, %138 : vector<8x32xf32>
    %140 = vector.broadcast %19 : vector<1x32xf32> to vector<8x32xf32>
    %141 = arith.addf %139, %140 : vector<8x32xf32>
    %142 = arith.truncf %141 : vector<8x32xf32> to vector<8x32xbf16>
    %cst_61 = arith.constant dense<0.000000e+00> : vector<8x32xf32>
    %143 = tpu.matmul %142, %7, %cst_61 {dimension_numbers = #tpu.dot_dimension_numbers<[1], [0], [0], [1], [0, 0, 1, 1], [], []>} : vector<8x32xbf16>, vector<32x32xbf16>, vector<8x32xf32> -> vector<8x32xf32>
    %144 = vector.broadcast %13 : vector<1x32xf32> to vector<8x32xf32>
    %145 = arith.addf %143, %144 : vector<8x32xf32>
    %cst_62 = arith.constant dense<0.000000e+00> : vector<8x64xf32>
    %146 = tpu.matmul %3, %5, %cst_62 {dimension_numbers = #tpu.dot_dimension_numbers<[1], [0], [0], [1], [0, 0, 1, 1], [], []>} : vector<8x32xbf16>, vector<32x64xbf16>, vector<8x64xf32> -> vector<8x64xf32>
    %147 = vector.broadcast %12 : vector<1x64xf32> to vector<8x64xf32>
    %148 = arith.addf %146, %147 : vector<8x64xf32>
    %149 = vector.extract_strided_slice %148 {offsets = [0, 0], sizes = [8, 32], strides = [1, 1]} : vector<8x64xf32> to vector<8x32xf32>
    %150 = vector.extract_strided_slice %148 {offsets = [0, 32], sizes = [8, 32], strides = [1, 1]} : vector<8x64xf32> to vector<8x32xf32>
    %151 = arith.truncf %145 : vector<8x32xf32> to vector<8x32xbf16>
    %152 = arith.truncf %149 : vector<8x32xf32> to vector<8x32xbf16>
    %153 = arith.truncf %150 : vector<8x32xf32> to vector<8x32xbf16>
    %154 = vector.extract_strided_slice %151 {offsets = [0, 0], sizes = [8, 8], strides = [1, 1]} : vector<8x32xbf16> to vector<8x8xbf16>
    %155 = vector.extract_strided_slice %152 {offsets = [0, 0], sizes = [8, 8], strides = [1, 1]} : vector<8x32xbf16> to vector<8x8xbf16>
    %cst_63 = arith.constant dense<0.000000e+00> : vector<8x8xf32>
    %156 = tpu.matmul %154, %155, %cst_63 {dimension_numbers = #tpu.dot_dimension_numbers<[1], [1], [0], [0], [0, 0, 1, 0], [], []>} : vector<8x8xbf16>, vector<8x8xbf16>, vector<8x8xf32> -> vector<8x8xf32>
    %157 = arith.addf %156, %23 : vector<8x8xf32>
    %cst_64 = arith.constant dense<0xFF800000> : vector<8xf32>
    %158 = vector.multi_reduction <maximumf>, %157, %cst_64 [1] : vector<8x8xf32> to vector<8xf32>
    %159 = vector.shape_cast %158 : vector<8xf32> to vector<8x1xf32>
    %160 = vector.broadcast %159 : vector<8x1xf32> to vector<8x8xf32>
    %161 = arith.subf %157, %160 : vector<8x8xf32>
    %162 = math.exp %161 : vector<8x8xf32>
    %cst_65 = arith.constant dense<0.000000e+00> : vector<8xf32>
    %163 = vector.multi_reduction <add>, %162, %cst_65 [1] : vector<8x8xf32> to vector<8xf32>
    %164 = vector.shape_cast %163 : vector<8xf32> to vector<8x1xf32>
    %165 = tpu.reciprocal %164 {approx = true} : vector<8x1xf32> -> vector<8x1xf32>
    %166 = vector.broadcast %165 : vector<8x1xf32> to vector<8x8xf32>
    %167 = arith.mulf %162, %166 : vector<8x8xf32>
    %168 = arith.truncf %167 : vector<8x8xf32> to vector<8x8xbf16>
    %169 = vector.extract_strided_slice %153 {offsets = [0, 0], sizes = [8, 8], strides = [1, 1]} : vector<8x32xbf16> to vector<8x8xbf16>
    %cst_66 = arith.constant dense<0.000000e+00> : vector<8x8xf32>
    %170 = tpu.matmul %168, %169, %cst_66 {dimension_numbers = #tpu.dot_dimension_numbers<[1], [0], [0], [1], [0, 0, 1, 1], [], []>} : vector<8x8xbf16>, vector<8x8xbf16>, vector<8x8xf32> -> vector<8x8xf32>
    %c0_67 = arith.constant 0 : index
    %c0_68 = arith.constant 0 : index
    %171 = vector.load %arg7[%c0_67, %c0_68] : memref<8x32xf32, #tpu.memory_space<vmem>>, vector<8x8xf32>
    tpu.vector_store %arg7[%c0_67, %c0_68], %170 {strides = array<i32>} : memref<8x32xf32, #tpu.memory_space<vmem>>, vector<8x8xf32>,
    %172 = vector.extract_strided_slice %151 {offsets = [0, 8], sizes = [8, 8], strides = [1, 1]} : vector<8x32xbf16> to vector<8x8xbf16>
    %173 = vector.extract_strided_slice %152 {offsets = [0, 8], sizes = [8, 8], strides = [1, 1]} : vector<8x32xbf16> to vector<8x8xbf16>
    %cst_69 = arith.constant dense<0.000000e+00> : vector<8x8xf32>
    %174 = tpu.matmul %172, %173, %cst_69 {dimension_numbers = #tpu.dot_dimension_numbers<[1], [1], [0], [0], [0, 0, 1, 0], [], []>} : vector<8x8xbf16>, vector<8x8xbf16>, vector<8x8xf32> -> vector<8x8xf32>
    %175 = arith.addf %174, %23 : vector<8x8xf32>
    %cst_70 = arith.constant dense<0xFF800000> : vector<8xf32>
    %176 = vector.multi_reduction <maximumf>, %175, %cst_70 [1] : vector<8x8xf32> to vector<8xf32>
    %177 = vector.shape_cast %176 : vector<8xf32> to vector<8x1xf32>
    %178 = vector.broadcast %177 : vector<8x1xf32> to vector<8x8xf32>
    %179 = arith.subf %175, %178 : vector<8x8xf32>
    %180 = math.exp %179 : vector<8x8xf32>
    %cst_71 = arith.constant dense<0.000000e+00> : vector<8xf32>
    %181 = vector.multi_reduction <add>, %180, %cst_71 [1] : vector<8x8xf32> to vector<8xf32>
    %182 = vector.shape_cast %181 : vector<8xf32> to vector<8x1xf32>
    %183 = tpu.reciprocal %182 {approx = true} : vector<8x1xf32> -> vector<8x1xf32>
    %184 = vector.broadcast %183 : vector<8x1xf32> to vector<8x8xf32>
    %185 = arith.mulf %180, %184 : vector<8x8xf32>
    %186 = arith.truncf %185 : vector<8x8xf32> to vector<8x8xbf16>
    %187 = vector.extract_strided_slice %153 {offsets = [0, 8], sizes = [8, 8], strides = [1, 1]} : vector<8x32xbf16> to vector<8x8xbf16>
    %cst_72 = arith.constant dense<0.000000e+00> : vector<8x8xf32>
    %188 = tpu.matmul %186, %187, %cst_72 {dimension_numbers = #tpu.dot_dimension_numbers<[1], [0], [0], [1], [0, 0, 1, 1], [], []>} : vector<8x8xbf16>, vector<8x8xbf16>, vector<8x8xf32> -> vector<8x8xf32>
    %c0_73 = arith.constant 0 : index
    %c8_74 = arith.constant 8 : index
    %189 = vector.load %arg7[%c0_73, %c8_74] : memref<8x32xf32, #tpu.memory_space<vmem>>, vector<8x8xf32>
    tpu.vector_store %arg7[%c0_73, %c8_74], %188 {strides = array<i32>} : memref<8x32xf32, #tpu.memory_space<vmem>>, vector<8x8xf32>,
    %190 = vector.extract_strided_slice %151 {offsets = [0, 16], sizes = [8, 8], strides = [1, 1]} : vector<8x32xbf16> to vector<8x8xbf16>
    %191 = vector.extract_strided_slice %152 {offsets = [0, 16], sizes = [8, 8], strides = [1, 1]} : vector<8x32xbf16> to vector<8x8xbf16>
    %cst_75 = arith.constant dense<0.000000e+00> : vector<8x8xf32>
    %192 = tpu.matmul %190, %191, %cst_75 {dimension_numbers = #tpu.dot_dimension_numbers<[1], [1], [0], [0], [0, 0, 1, 0], [], []>} : vector<8x8xbf16>, vector<8x8xbf16>, vector<8x8xf32> -> vector<8x8xf32>
    %193 = arith.addf %192, %23 : vector<8x8xf32>
    %cst_76 = arith.constant dense<0xFF800000> : vector<8xf32>
    %194 = vector.multi_reduction <maximumf>, %193, %cst_76 [1] : vector<8x8xf32> to vector<8xf32>
    %195 = vector.shape_cast %194 : vector<8xf32> to vector<8x1xf32>
    %196 = vector.broadcast %195 : vector<8x1xf32> to vector<8x8xf32>
    %197 = arith.subf %193, %196 : vector<8x8xf32>
    %198 = math.exp %197 : vector<8x8xf32>
    %cst_77 = arith.constant dense<0.000000e+00> : vector<8xf32>
    %199 = vector.multi_reduction <add>, %198, %cst_77 [1] : vector<8x8xf32> to vector<8xf32>
    %200 = vector.shape_cast %199 : vector<8xf32> to vector<8x1xf32>
    %201 = tpu.reciprocal %200 {approx = true} : vector<8x1xf32> -> vector<8x1xf32>
    %202 = vector.broadcast %201 : vector<8x1xf32> to vector<8x8xf32>
    %203 = arith.mulf %198, %202 : vector<8x8xf32>
    %204 = arith.truncf %203 : vector<8x8xf32> to vector<8x8xbf16>
    %205 = vector.extract_strided_slice %153 {offsets = [0, 16], sizes = [8, 8], strides = [1, 1]} : vector<8x32xbf16> to vector<8x8xbf16>
    %cst_78 = arith.constant dense<0.000000e+00> : vector<8x8xf32>
    %206 = tpu.matmul %204, %205, %cst_78 {dimension_numbers = #tpu.dot_dimension_numbers<[1], [0], [0], [1], [0, 0, 1, 1], [], []>} : vector<8x8xbf16>, vector<8x8xbf16>, vector<8x8xf32> -> vector<8x8xf32>
    %c0_79 = arith.constant 0 : index
    %c16_80 = arith.constant 16 : index
    %207 = vector.load %arg7[%c0_79, %c16_80] : memref<8x32xf32, #tpu.memory_space<vmem>>, vector<8x8xf32>
    tpu.vector_store %arg7[%c0_79, %c16_80], %206 {strides = array<i32>} : memref<8x32xf32, #tpu.memory_space<vmem>>, vector<8x8xf32>,
    %208 = vector.extract_strided_slice %151 {offsets = [0, 24], sizes = [8, 8], strides = [1, 1]} : vector<8x32xbf16> to vector<8x8xbf16>
    %209 = vector.extract_strided_slice %152 {offsets = [0, 24], sizes = [8, 8], strides = [1, 1]} : vector<8x32xbf16> to vector<8x8xbf16>
    %cst_81 = arith.constant dense<0.000000e+00> : vector<8x8xf32>
    %210 = tpu.matmul %208, %209, %cst_81 {dimension_numbers = #tpu.dot_dimension_numbers<[1], [1], [0], [0], [0, 0, 1, 0], [], []>} : vector<8x8xbf16>, vector<8x8xbf16>, vector<8x8xf32> -> vector<8x8xf32>
    %211 = arith.addf %210, %23 : vector<8x8xf32>
    %cst_82 = arith.constant dense<0xFF800000> : vector<8xf32>
    %212 = vector.multi_reduction <maximumf>, %211, %cst_82 [1] : vector<8x8xf32> to vector<8xf32>
    %213 = vector.shape_cast %212 : vector<8xf32> to vector<8x1xf32>
    %214 = vector.broadcast %213 : vector<8x1xf32> to vector<8x8xf32>
    %215 = arith.subf %211, %214 : vector<8x8xf32>
    %216 = math.exp %215 : vector<8x8xf32>
    %cst_83 = arith.constant dense<0.000000e+00> : vector<8xf32>
    %217 = vector.multi_reduction <add>, %216, %cst_83 [1] : vector<8x8xf32> to vector<8xf32>
    %218 = vector.shape_cast %217 : vector<8xf32> to vector<8x1xf32>
    %219 = tpu.reciprocal %218 {approx = true} : vector<8x1xf32> -> vector<8x1xf32>
    %220 = vector.broadcast %219 : vector<8x1xf32> to vector<8x8xf32>
    %221 = arith.mulf %216, %220 : vector<8x8xf32>
    %222 = arith.truncf %221 : vector<8x8xf32> to vector<8x8xbf16>
    %223 = vector.extract_strided_slice %153 {offsets = [0, 24], sizes = [8, 8], strides = [1, 1]} : vector<8x32xbf16> to vector<8x8xbf16>
    %cst_84 = arith.constant dense<0.000000e+00> : vector<8x8xf32>
    %224 = tpu.matmul %222, %223, %cst_84 {dimension_numbers = #tpu.dot_dimension_numbers<[1], [0], [0], [1], [0, 0, 1, 1], [], []>} : vector<8x8xbf16>, vector<8x8xbf16>, vector<8x8xf32> -> vector<8x8xf32>
    %c0_85 = arith.constant 0 : index
    %c24_86 = arith.constant 24 : index
    %225 = vector.load %arg7[%c0_85, %c24_86] : memref<8x32xf32, #tpu.memory_space<vmem>>, vector<8x8xf32>
    tpu.vector_store %arg7[%c0_85, %c24_86], %224 {strides = array<i32>} : memref<8x32xf32, #tpu.memory_space<vmem>>, vector<8x8xf32>,
    %c0_87 = arith.constant 0 : index
    %c0_88 = arith.constant 0 : index
    %226 = vector.load %arg7[%c0_87, %c0_88] : memref<8x32xf32, #tpu.memory_space<vmem>>, vector<8x32xf32>
    %227 = arith.truncf %226 : vector<8x32xf32> to vector<8x32xbf16>
    %cst_89 = arith.constant dense<0.000000e+00> : vector<8x32xf32>
    %228 = tpu.matmul %227, %8, %cst_89 {dimension_numbers = #tpu.dot_dimension_numbers<[1], [0], [0], [1], [0, 0, 1, 1], [], []>} : vector<8x32xbf16>, vector<32x32xbf16>, vector<8x32xf32> -> vector<8x32xf32>
    %229 = vector.broadcast %15 : vector<1x32xf32> to vector<8x32xf32>
    %230 = arith.addf %228, %229 : vector<8x32xf32>
    %231 = arith.addf %141, %230 : vector<8x32xf32>
    %232 = arith.truncf %231 : vector<8x32xf32> to vector<8x32xbf16>
    %cst_90 = arith.constant dense<0.000000e+00> : vector<8x32xf32>
    %233 = tpu.matmul %232, %9, %cst_90 {dimension_numbers = #tpu.dot_dimension_numbers<[1], [0], [0], [1], [0, 0, 1, 1], [], []>} : vector<8x32xbf16>, vector<32x32xbf16>, vector<8x32xf32> -> vector<8x32xf32>
    %234 = vector.broadcast %16 : vector<1x32xf32> to vector<8x32xf32>
    %235 = arith.addf %233, %234 : vector<8x32xf32>
    %cst_91 = arith.constant 0.000000e+00 : f32
    %236 = vector.broadcast %cst_91 : f32 to vector<8x32xf32>
    %237 = arith.maximumf %235, %236 : vector<8x32xf32>
    %238 = arith.truncf %237 : vector<8x32xf32> to vector<8x32xbf16>
    %cst_92 = arith.constant dense<0.000000e+00> : vector<8x32xf32>
    %239 = tpu.matmul %238, %10, %cst_92 {dimension_numbers = #tpu.dot_dimension_numbers<[1], [0], [0], [1], [0, 0, 1, 1], [], []>} : vector<8x32xbf16>, vector<32x32xbf16>, vector<8x32xf32> -> vector<8x32xf32>
    %240 = vector.broadcast %17 : vector<1x32xf32> to vector<8x32xf32>
    %241 = arith.addf %239, %240 : vector<8x32xf32>
    %242 = arith.addf %231, %241 : vector<8x32xf32>
    %cst_93 = arith.constant dense<0.000000e+00> : vector<8xf32>
    %243 = vector.multi_reduction <add>, %242, %cst_93 [1] : vector<8x32xf32> to vector<8xf32>
    %244 = vector.shape_cast %243 : vector<8xf32> to vector<8x1xf32>
    %cst_94 = arith.constant 3.200000e+01 : f32
    %245 = vector.broadcast %cst_94 : f32 to vector<8x1xf32>
    %246 = arith.divf %244, %245 : vector<8x1xf32>
    %247 = vector.broadcast %246 : vector<8x1xf32> to vector<8x32xf32>
    %248 = arith.subf %242, %247 : vector<8x32xf32>
    %249 = arith.mulf %248, %248 : vector<8x32xf32>
    %cst_95 = arith.constant dense<0.000000e+00> : vector<8xf32>
    %250 = vector.multi_reduction <add>, %249, %cst_95 [1] : vector<8x32xf32> to vector<8xf32>
    %251 = vector.shape_cast %250 : vector<8xf32> to vector<8x1xf32>
    %cst_96 = arith.constant 3.200000e+01 : f32
    %252 = vector.broadcast %cst_96 : f32 to vector<8x1xf32>
    %253 = arith.divf %251, %252 : vector<8x1xf32>
    %254 = vector.broadcast %246 : vector<8x1xf32> to vector<8x32xf32>
    %255 = arith.subf %242, %254 : vector<8x32xf32>
    %cst_97 = arith.constant 9.99999974E-6 : f32
    %256 = vector.broadcast %cst_97 : f32 to vector<8x1xf32>
    %257 = arith.addf %253, %256 : vector<8x1xf32>
    %258 = math.rsqrt %257 : vector<8x1xf32>
    %259 = vector.broadcast %258 : vector<8x1xf32> to vector<8x32xf32>
    %260 = arith.mulf %255, %259 : vector<8x32xf32>
    %261 = vector.broadcast %20 : vector<1x32xf32> to vector<8x32xf32>
    %262 = arith.mulf %260, %261 : vector<8x32xf32>
    %263 = vector.broadcast %21 : vector<1x32xf32> to vector<8x32xf32>
    %264 = arith.addf %262, %263 : vector<8x32xf32>
    %c0_98 = arith.constant 0 : index
    %c0_99 = arith.constant 0 : index
    %c0_100 = arith.constant 0 : index
    %265 = vector.load %arg6[%c0_98, %c0_99, %c0_100] : memref<1x8x32xf32, #tpu.memory_space<vmem>>, vector<1x8x32xf32>
    %266 = vector.shape_cast %265 : vector<1x8x32xf32> to vector<8x32xf32>
    %267 = vector.shape_cast %264 : vector<8x32xf32> to vector<1x8x32xf32>
    tpu.vector_store %arg6[%c0_98, %c0_99, %c0_100], %267 {strides = array<i32>} : memref<1x8x32xf32, #tpu.memory_space<vmem>>, vector<1x8x32xf32>,
    return
  }
  func.func @transform_0(%arg0: i32) -> (i32, i32, i32) {
    %c0_i32 = arith.constant 0 : i32
    %c0_i32_0 = arith.constant 0 : i32
    %c0_i32_1 = arith.constant 0 : i32
    return %arg0, %c0_i32, %c0_i32_0 : i32, i32, i32
  }
  func.func @transform_1(%arg0: i32) -> (i32, i32, i32) {
    %c0_i32 = arith.constant 0 : i32
    %c0_i32_0 = arith.constant 0 : i32
    %c0_i32_1 = arith.constant 0 : i32
    return %arg0, %c0_i32, %c0_i32_0 : i32, i32, i32
  }
  func.func @transform_2(%arg0: i32) -> (i32, i32) {
    %c0_i32 = arith.constant 0 : i32
    %c0_i32_0 = arith.constant 0 : i32
    %c0_i32_1 = arith.constant 0 : i32
    return %c0_i32, %c0_i32_0 : i32, i32
  }
  func.func @transform_3(%arg0: i32) -> (i32, i32) {
    %c0_i32 = arith.constant 0 : i32
    %c0_i32_0 = arith.constant 0 : i32
    %c0_i32_1 = arith.constant 0 : i32
    return %c0_i32, %c0_i32_0 : i32, i32
  }
  func.func @transform_4(%arg0: i32) -> (i32, i32) {
    %c0_i32 = arith.constant 0 : i32
    %c0_i32_0 = arith.constant 0 : i32
    %c0_i32_1 = arith.constant 0 : i32
    return %c0_i32, %c0_i32_0 : i32, i32
  }
  func.func @transform_5(%arg0: i32) -> (i32, i32, i32) {
    %c0_i32 = arith.constant 0 : i32
    %c0_i32_0 = arith.constant 0 : i32
    %c0_i32_1 = arith.constant 0 : i32
    return %arg0, %c0_i32, %c0_i32_0 : i32, i32, i32
  }
}

</mosaic_0001>

<llo_original>
// kernel: tpu_custom_call.1
$region0: #{tpu_custom_call.1}
  #allocation0 [shape = 'u32[]', space=smem, size = 0x4, offset = 0x4, fixed_abs, tag = 'smem constant byte address 0x4 - core index']
  #allocation1 [shape = 'u32[144,128]{1,0:T(1,128)}', space=vmem, size = 0x12000, scoped, tag = 'internal scratch']
  #allocation2 [shape = 'f32[8,32]{1,0:T(8,128)}', space=vmem, size = 0x1000, scoped, tag = 'scratch operand']
  %s0 = inlined_call_operand.vmem [shape: s32[2,8,1], index: 0, kind: input, shape index: {}]
  %s1 = inlined_call_operand.vmem [shape: bf16[2,8,32], index: 1, kind: input, shape index: {}]
  %s2 = inlined_call_operand.vmem [shape: bf16[32,160], index: 2, kind: input, shape index: {}]
  %s3 = inlined_call_operand.vmem [shape: bf16[160,32], index: 3, kind: input, shape index: {}]
  %s4 = inlined_call_operand.vmem [shape: f32[77,96], index: 4, kind: input, shape index: {}]
  %s5 = inlined_call_operand.hbm [shape: f32[2,8,32], index: 5, kind: output, shape index: {}]
  %s6 = sld [smem:[#allocation0]]
  $region53: #{tpu_custom_call.1} parent=0
    _
  %s8 = ssub.s32 1, %s6
  %s9 = scalar_select 0, %s8, %s6
  $region1: #{tpu_custom_call.1} parent=0
    #allocation3 [shape = 'u8[8192]{0}', space=vmem, size = 0x2000, scoped, tag = 'output window, operand 0']
    #allocation4 [shape = 's32[2]{0}', space=sflag, size = 0x8, scoped, tag = 'scoped memory for tpu_custom_call.1']
    %10 = vsyncpa [#allocation4], 0
    %s11 = scalar_lea.sflag [#allocation4], 1
    %12 = vsyncpa %s11, 0
    loop: start=0, step=1, limit=4
    $region2: #{tpu_custom_call.1} parent=1 // loop_pre_header
      _
    $region3: #{tpu_custom_call.1} parent=1 // loop_header
      %s14 = sphi 0, %s18
      %p15 = scmp.ge.s32.totalorder %s14, 4
      %s24 = sphi 0, %s26
      %s27 = sphi 0, %s24
      %s28 = sphi 0, %s27
      %s44 = sphi 0, %s28
      %s50 = sphi 0, %s52
      %s53 = sphi 0, %s50
      %s54 = sphi 0, %s53
      %s70 = sphi 0, %s54
      %s74 = sphi 0, %s74
      %s76 = sphi 0, %s74
      %s77 = sphi 0, %s76
      %s91 = sphi 0, %s77
      %s95 = sphi 0, %s95
      %s97 = sphi 0, %s95
      %s98 = sphi 0, %s97
      %s112 = sphi 0, %s98
      %s116 = sphi 0, %s116
      %s118 = sphi 0, %s116
      %s119 = sphi 0, %s118
      %s133 = sphi 0, %s119
      %s139 = sphi 0, %s141
      %s142 = sphi 0, %s139
      %s143 = sphi 0, %s142
      %s159 = sphi 0, %s143
    $region4: #{tpu_custom_call.1} parent=1 // loop_header_branch
      %17 = sbr.rel (%p15) target = $region8
    $region5: #{tpu_custom_call.1} parent=1 // loop_body
      %s19 = ssub.s32 %s14, 1
      %s20 = ssub.s32 %s14, 2
      %s21 = sadd.s32 %s14, 1
      %s22 = ssub.s32 %s14, %s21
      %p23 = scmp.eq.s32.totalorder %s22, 0
      %s25 = sadd.s32 %s24, 1
      %s26 = scalar_select %p23, %s24, %s25
      %p29 = pneg %p23
      %p30 = scmp.eq.s32.totalorder %s14, 1
      %p31 = por %p29, %p30
      %p32 = scmp.ne.s32.totalorder %s24, %s27
      %p33 = scmp.eq.s32.totalorder %s14, 0
      %p34 = por %p32, %p33
      %p35 = scmp.ne.s32.totalorder %s24, %s27
      %p36 = scmp.eq.s32.totalorder %s19, 1
      %p37 = por %p35, %p36
      %p38 = scmp.ne.s32.totalorder %s27, %s28
      %p39 = scmp.eq.s32.totalorder %s19, 0
      %p40 = por %p38, %p39
      %p41 = scmp.ne.s32.totalorder %s27, %s28
      %p42 = scmp.eq.s32.totalorder %s20, 1
      %p43 = por %p41, %p42
      %p45 = scmp.ne.s32.totalorder %s28, %s44
      %p46 = scmp.eq.s32.totalorder %s20, 0
      %p47 = por %p45, %p46
      %s48 = ssub.s32 %s14, %s21
      %p49 = scmp.eq.s32.totalorder %s48, 0
      %s51 = sadd.s32 %s50, 1
      %s52 = scalar_select %p49, %s50, %s51
      %p55 = pneg %p49
      %p56 = scmp.eq.s32.totalorder %s14, 1
      %p57 = por %p55, %p56
      %p58 = scmp.ne.s32.totalorder %s50, %s53
      %p59 = scmp.eq.s32.totalorder %s14, 0
      %p60 = por %p58, %p59
      %p61 = scmp.ne.s32.totalorder %s50, %s53
      %p62 = scmp.eq.s32.totalorder %s19, 1
      %p63 = por %p61, %p62
      %p64 = scmp.ne.s32.totalorder %s53, %s54
      %p65 = scmp.eq.s32.totalorder %s19, 0
      %p66 = por %p64, %p65
      %p67 = scmp.ne.s32.totalorder %s53, %s54
      %p68 = scmp.eq.s32.totalorder %s20, 1
      %p69 = por %p67, %p68
      %p71 = scmp.ne.s32.totalorder %s54, %s70
      %p72 = scmp.eq.s32.totalorder %s20, 0
      %p73 = por %p71, %p72
      %s75 = sadd.s32 %s74, 1
      %p78 = scmp.eq.s32.totalorder %s14, 1
      %p79 = scmp.ne.s32.totalorder %s74, %s76
      %p80 = scmp.eq.s32.totalorder %s14, 0
      %p81 = por %p79, %p80
      %p82 = scmp.ne.s32.totalorder %s74, %s76
      %p83 = scmp.eq.s32.totalorder %s19, 1
      %p84 = por %p82, %p83
      %p85 = scmp.ne.s32.totalorder %s76, %s77
      %p86 = scmp.eq.s32.totalorder %s19, 0
      %p87 = por %p85, %p86
      %p88 = scmp.ne.s32.totalorder %s76, %s77
      %p89 = scmp.eq.s32.totalorder %s20, 1
      %p90 = por %p88, %p89
      %p92 = scmp.ne.s32.totalorder %s77, %s91
      %p93 = scmp.eq.s32.totalorder %s20, 0
      %p94 = por %p92, %p93
      %s96 = sadd.s32 %s95, 1
      %p99 = scmp.eq.s32.totalorder %s14, 1
      %p100 = scmp.ne.s32.totalorder %s95, %s97
      %p101 = scmp.eq.s32.totalorder %s14, 0
      %p102 = por %p100, %p101
      %p103 = scmp.ne.s32.totalorder %s95, %s97
      %p104 = scmp.eq.s32.totalorder %s19, 1
      %p105 = por %p103, %p104
      %p106 = scmp.ne.s32.totalorder %s97, %s98
      %p107 = scmp.eq.s32.totalorder %s19, 0
      %p108 = por %p106, %p107
      %p109 = scmp.ne.s32.totalorder %s97, %s98
      %p110 = scmp.eq.s32.totalorder %s20, 1
      %p111 = por %p109, %p110
      %p113 = scmp.ne.s32.totalorder %s98, %s112
      %p114 = scmp.eq.s32.totalorder %s20, 0
      %p115 = por %p113, %p114
      %s117 = sadd.s32 %s116, 1
      %p120 = scmp.eq.s32.totalorder %s14, 1
      %p121 = scmp.ne.s32.totalorder %s116, %s118
      %p122 = scmp.eq.s32.totalorder %s14, 0
      %p123 = por %p121, %p122
      %p124 = scmp.ne.s32.totalorder %s116, %s118
      %p125 = scmp.eq.s32.totalorder %s19, 1
      %p126 = por %p124, %p125
      %p127 = scmp.ne.s32.totalorder %s118, %s119
      %p128 = scmp.eq.s32.totalorder %s19, 0
      %p129 = por %p127, %p128
      %p130 = scmp.ne.s32.totalorder %s118, %s119
      %p131 = scmp.eq.s32.totalorder %s20, 1
      %p132 = por %p130, %p131
      %p134 = scmp.ne.s32.totalorder %s119, %s133
      %p135 = scmp.eq.s32.totalorder %s20, 0
      %p136 = por %p134, %p135
      %s137 = ssub.s32 %s14, %s21
      %p138 = scmp.eq.s32.totalorder %s137, 0
      %s140 = sadd.s32 %s139, 1
      %s141 = scalar_select %p138, %s139, %s140
      %p144 = pneg %p138
      %p145 = scmp.eq.s32.totalorder %s14, 1
      %p146 = por %p144, %p145
      %p147 = scmp.ne.s32.totalorder %s139, %s142
      %p148 = scmp.eq.s32.totalorder %s14, 0
      %p149 = por %p147, %p148
      %p150 = scmp.ne.s32.totalorder %s139, %s142
      %p151 = scmp.eq.s32.totalorder %s19, 1
      %p152 = por %p150, %p151
      %p153 = scmp.ne.s32.totalorder %s142, %s143
      %p154 = scmp.eq.s32.totalorder %s19, 0
      %p155 = por %p153, %p154
      %p156 = scmp.ne.s32.totalorder %s142, %s143
      %p157 = scmp.eq.s32.totalorder %s20, 1
      %p158 = por %p156, %p157
      %p160 = scmp.ne.s32.totalorder %s143, %s159
      %p161 = scmp.eq.s32.totalorder %s20, 0
      %p162 = por %p160, %p161
      %p163 = scmp.le.s32.totalorder 1, %s14
      %p164 = scmp.lt.s32.totalorder %s14, 3
      %p165 = pnand %p163, %p164
      %p166 = pneg %p165
      // Predicated region
      $region9: #{tpu_custom_call.1} parent=5 // pred_check
        _
      $region10: #{tpu_custom_call.1} parent=5 // pred_check_branch
        %168 = sbr.rel (%p165) target = $region12
      $region11: #{tpu_custom_call.1} parent=5 // pred_region
        %s169 = ssub.s32 %s14, 1
        // Predicated region
        $region13: #{tpu_custom_call.1} parent=11 // pred_check
          %p170 = pneg %p87
        $region14: #{tpu_custom_call.1} parent=11 // pred_check_branch
          %172 = sbr.rel (%p170) target = $region16
        $region15: #{tpu_custom_call.1} parent=11 // pred_region
          _
        $region16: #{tpu_custom_call.1} parent=11 // pred_fallthru
          _
        // Predicated region
        $region17: #{tpu_custom_call.1} parent=11 // pred_check
          %p173 = pneg %p108
        $region18: #{tpu_custom_call.1} parent=11 // pred_check_branch
          %175 = sbr.rel (%p173) target = $region20
        $region19: #{tpu_custom_call.1} parent=11 // pred_region
          _
        $region20: #{tpu_custom_call.1} parent=11 // pred_fallthru
          _
        // Predicated region
        $region21: #{tpu_custom_call.1} parent=11 // pred_check
          %p176 = pneg %p129
        $region22: #{tpu_custom_call.1} parent=11 // pred_check_branch
          %178 = sbr.rel (%p176) target = $region24
        $region23: #{tpu_custom_call.1} parent=11 // pred_region
          _
        $region24: #{tpu_custom_call.1} parent=11 // pred_fallthru
          _
      $region12: #{tpu_custom_call.1} parent=5 // pred_fallthru
        _
      %p179 = scmp.lt.s32.totalorder %s14, 2
      // Predicated region
      $region25: #{tpu_custom_call.1} parent=5 // pred_check
        %p180 = pneg %p179
      $region26: #{tpu_custom_call.1} parent=5 // pred_check_branch
        %182 = sbr.rel (%p180) target = $region28
      $region27: #{tpu_custom_call.1} parent=5 // pred_region
        // Predicated region
        $region29: #{tpu_custom_call.1} parent=27 // pred_check
          %p183 = pneg %p34
        $region30: #{tpu_custom_call.1} parent=27 // pred_check_branch
          %185 = sbr.rel (%p183) target = $region32
        $region31: #{tpu_custom_call.1} parent=27 // pred_region
          %p186 = scmp.lt.s32.totalorder %s14, 1
          %s187 = scalar_select %p186, %s14, 1
          %s188 = smul.addr %s187, 8
          %s189 = scalar_lea.vmem %s0, %s188
        $region32: #{tpu_custom_call.1} parent=27 // pred_fallthru
          _
        // Predicated region
        $region33: #{tpu_custom_call.1} parent=27 // pred_check
          %p190 = pneg %p60
        $region34: #{tpu_custom_call.1} parent=27 // pred_check_branch
          %192 = sbr.rel (%p190) target = $region36
        $region35: #{tpu_custom_call.1} parent=27 // pred_region
          %p193 = scmp.lt.s32.totalorder %s14, 1
          %s194 = scalar_select %p193, %s14, 1
          %s195 = smul.addr %s194, 4
          %s196 = scalar_lea.vmem %s1, %s195
        $region36: #{tpu_custom_call.1} parent=27 // pred_fallthru
          _
      $region28: #{tpu_custom_call.1} parent=5 // pred_fallthru
        _
      %p197 = scmp.le.s32.totalorder 1, %s14
      %p198 = scmp.lt.s32.totalorder %s14, 3
      %p199 = pnand %p197, %p198
      %p200 = pneg %p199
      // Predicated region
      $region37: #{tpu_custom_call.1} parent=5 // pred_check
        _
      $region38: #{tpu_custom_call.1} parent=5 // pred_check_branch
        %202 = sbr.rel (%p199) target = $region40
      $region39: #{tpu_custom_call.1} parent=5 // pred_region
        %s203 = ssub.s32 %s14, 1
        %p204 = scmp.lt.s32.totalorder %s19, 1
        %s205 = scalar_select %p204, %s19, 1
        %s206 = smul.addr %s205, 8
        %s207 = scalar_lea.vmem %s0, %s206
        %p208 = pneg %p40
        %p209 = pneg %p37
        %p210 = scmp.lt.s32.totalorder %s19, 1
        %s211 = scalar_select %p210, %s19, 1
        %s212 = smul.addr %s211, 4
        %s213 = scalar_lea.vmem %s1, %s212
        %p214 = pneg %p66
        %p215 = pneg %p63
        %p216 = pneg %p87
        %p217 = pneg %p84
        %p218 = pneg %p108
        %p219 = pneg %p105
        %p220 = pneg %p129
        %p221 = pneg %p126
        %p222 = pneg %p155
        %p223 = pneg %p152
        %s224 = sand.u32 %s142, 1
        %s225 = scalar_lea.sflag [#allocation4], %s224
        %s226 = sand.u32 %s142, 1
        %s227 = smul.addr %s226, 8
        %s228 = scalar_lea.vmem [#allocation3], %s227
        %p229 = scmp.lt.s32.totalorder %s19, 1
        %s230 = scalar_select %p229, %s19, 1
        %s231 = smul.addr %s230, 8
        %s232 = scalar_lea.vmem %s0, %s231
        %p233 = scmp.lt.s32.totalorder %s19, 1
        %s234 = scalar_select %p233, %s19, 1
        %s235 = smul.addr %s234, 4
        %s236 = scalar_lea.vmem %s1, %s235
        %v238 = vld [vmem:[%s232] sm:$0xff]
        %v239 = vld [vmem:[%s236] sm:$0xf]
        %v240 = vld [vmem:[%s2] sm:$0xf]
        %v241 = vld [vmem:[%s2 + $0x8] sm:$0xf]
        %v242 = vld [vmem:[%s2 + $0x10] sm:$0xf]
        %v243 = vld [vmem:[%s2 + $0x18] sm:$0xf]
        %v244 = vld [vmem:[%s2] sm:$0xff]
        %v245 = vld [vmem:[%s2 + $0x8] sm:$0xff]
        %v246 = vld [vmem:[%s2 + $0x10] sm:$0xff]
        %v247 = vld [vmem:[%s2 + $0x18] sm:$0xff]
        %v248 = vld [vmem:[%s3] sm:$0xf]
        %v249 = vld [vmem:[%s3 + $0x4] sm:$0xf]
        %v250 = vld [vmem:[%s3 + $0x8] sm:$0xf]
        %v251 = vld [vmem:[%s3 + $0xc] sm:$0xf]
        %v252 = vld [vmem:[%s3 + $0x10] sm:$0xf]
        %v253 = vld [vmem:[%s3 + $0x14] sm:$0xf]
        %v254 = vld [vmem:[%s3 + $0x18] sm:$0xf]
        %v255 = vld [vmem:[%s3 + $0x1c] sm:$0xf]
        %v256 = vld [vmem:[%s3 + $0x20] sm:$0xf]
        %v257 = vld [vmem:[%s3 + $0x24] sm:$0xf]
        %v258 = vld [vmem:[%s3 + $0x28] sm:$0xf]
        %v259 = vld [vmem:[%s3 + $0x2c] sm:$0xf]
        %v260 = vld [vmem:[%s3 + $0x30] sm:$0xf]
        %v261 = vld [vmem:[%s3 + $0x34] sm:$0xf]
        %v262 = vld [vmem:[%s3 + $0x38] sm:$0xf]
        %v263 = vld [vmem:[%s3 + $0x3c] sm:$0xf]
        %v264 = vld [vmem:[%s3 + $0x40] sm:$0xf]
        %v265 = vld [vmem:[%s3 + $0x44] sm:$0xf]
        %v266 = vld [vmem:[%s3 + $0x48] sm:$0xf]
        %v267 = vld [vmem:[%s3 + $0x4c] sm:$0xf]
        %v268 = vld [vmem:[%s4] sm:$0x1]
        %v269 = vld [vmem:[%s4 + $0x1] sm:$0x1]
        %v270 = vld [vmem:[%s4 + $0x2] sm:$0x1]
        %v271 = vld [vmem:[%s4 + $0x3] sm:$0x1]
        %v272 = vld [vmem:[%s4 + $0x4] sm:$0x1]
        %v273 = vld [vmem:[%s4 + $0x5] sm:$0x1]
        %v274 = vld [vmem:[%s4 + $0x6] sm:$0x1]
        %v275 = vld [vmem:[%s4 + $0x7] sm:$0x1]
        %v276 = vld [vmem:[%s4 + $0x8] sm:$0x1]
        %v277 = vld [vmem:[%s4 + $0x9] sm:$0x1]
        %v278 = vld [vmem:[%s4 + $0xa] sm:$0x1]
        %v279 = vld [vmem:[%s4 + $0xb] sm:$0xff]
        %v280 = vld [vmem:[%s4 + $0x13] sm:$0xff]
        %v281 = vld [vmem:[%s4 + $0x1b] sm:$0xff]
        %v282 = vld [vmem:[%s4 + $0x23] sm:$0xff]
        %v283 = vld [vmem:[%s4 + $0x2b] sm:$0xff]
        %v284 = vld [vmem:[%s4 + $0x33] sm:$0xff]
        %v285 = vld [vmem:[%s4 + $0x3b] sm:$0xff]
        %v286 = vld [vmem:[%s4 + $0x43] sm:$0xff]
        %v287 = vld [vmem:[%s4 + $0x4b] sm:$0x3]
        %v288 = vlaneseq
        %v289 = vand.u32 %v288, 127
        %290 = vset.pattern.permute.xlu0 0
        %291 = vperm.xlu0 %290, %v238
        %v292 = vpop.permute.xlu0 %291
        %vm293 = vcmp.eq.s32.totalorder %v289, %v292
        %v294 = vsel %vm293, 1, 0
        %v295 = vcvt.s32.f32 %v294
        %vm296 = vcmask 408576
        %v298 = vsel %vm296, %v295, 0
        %vm300 = vcmask 1041408
        %v302 = vsel %vm300, %v287, 0
        %304 = vmatprep.subr.mxu0 0.0
        %305 = vmatpush1.msra.mxu0 0.0
        %306 = vmatprep.subr.mxu0 0.0
        %307 = vmatpush1.msra.mxu0 0.0
        %308 = vmatprep.subr.mxu0 0.0
        %309 = vmatpush1.msra.mxu0 0.0
        %310 = vmatprep.subr.mxu0 0.0
        %311 = vmatpush1.msra.mxu0 0.0
        %312 = vmatprep.subr.mxu0 0.0
        %313 = vmatpush1.msra.mxu0 0.0
        %314 = vmatprep.subr.mxu0 0.0
        %315 = vmatpush1.msra.mxu0 0.0
        %316 = vmatprep.subr.mxu0 0.0
        %317 = vmatpush1.msra.mxu0 0.0
        %318 = vmatprep.subr.mxu0 0.0
        %319 = vmatpush1.msra.mxu0 0.0
        %320 = vmatprep.subr.mxu0 0.0
        %321 = vmatpush1.msra.mxu0 0.0
        %322 = vmatprep.subr.mxu0 0.0
        %323 = vmatpush1.msra.mxu0 %v302
        %324 = vmatprep.subr.mxu0 0.0
        %325 = vmatpush1.msra.mxu0 %v286
        %326 = vmatprep.subr.mxu0 0.0
        %327 = vmatpush1.msra.mxu0 %v285
        %328 = vmatprep.subr.mxu0 0.0
        %329 = vmatpush1.msra.mxu0 %v284
        %330 = vmatprep.subr.mxu0 0.0
        %331 = vmatpush1.msra.mxu0 %v283
        %332 = vmatprep.subr.mxu0 0.0
        %333 = vmatpush1.msra.mxu0 %v282
        %334 = vmatprep.subr.mxu0 0.0
        %335 = vmatpush1.msra.mxu0 %v281
        %336 = vmatprep.subr.mxu0 0.0
        %337 = vmatpush2.msra.mxu0 0.0
        %338 = vmatprep.subr.mxu0 0.0
        %339 = vmatpush2.msra.mxu0 0.0
        %340 = vmatprep.subr.mxu0 0.0
        %341 = vmatpush2.msra.mxu0 0.0
        %342 = vmatprep.subr.mxu0 0.0
        %343 = vmatpush2.msra.mxu0 0.0
        %344 = vmatprep.subr.mxu0 0.0
        %345 = vmatpush2.msra.mxu0 0.0
        %346 = vmatprep.subr.mxu0 0.0
        %347 = vmatpush2.msra.mxu0 0.0
        %348 = vmatprep.subr.mxu0 0.0
        %349 = vmatpush2.msra.mxu0 0.0
        %350 = vmatprep.subr.mxu0 0.0
        %351 = vmatpush2.msra.mxu0 0.0
        %352 = vmatprep.subr.mxu0 0.0
        %353 = vmatpush2.msra.mxu0 0.0
        %354 = vmatprep.subr.mxu0 0.0
        %355 = vmatpush2.msra.mxu0 0.0
        %356 = vmatprep.subr.mxu0 0.0
        %357 = vmatpush2.msra.mxu0 0.0
        %358 = vmatprep.subr.mxu0 0.0
        %359 = vmatpush2.msra.mxu0 0.0
        %360 = vmatprep.subr.mxu0 0.0
        %361 = vmatpush2.msra.mxu0 0.0
        %362 = vmatprep.subr.mxu0 0.0
        %363 = vmatpush2.msra.mxu0 0.0
        %364 = vmatprep.subr.mxu0 0.0
        %365 = vmatpush2.msra.mxu0 0.0
        %366 = vmatprep.subr.mxu0 0.0
        %367 = vmatpush2.msra.mxu0 0.0
        %368 = vmatprep.mubr.f32.mxu0 0.0
        %369 = vmatmul.mubr.f32.gmra.mxu0 %v298
        %v370 = vpop.f32.mrf.mxu0
        %v371 = vadd.f32 %v279, %v370
        %v372 = vpop.f32.mrf.mxu0
        %373 = vdwg.mxu0
        %v374 = vpack.c.bf16 %v371, %v371
        %v375 = vlaneseq
        %v376 = vshrl.u32 %v375, 7
        %v377 = vsub.s32 0, %v376
        %v378 = vrot.slane %v268, %v377
        %v383 = vunpack.c.l.b16 %v240
        %v384 = vunpack.c.l.b16 %v241
        %v385 = vunpack.c.l.b16 %v242
        %v386 = vunpack.c.l.b16 %v243
        %v387 = vpack.c.b16 %v384, %v383
        %v388 = vpack.c.b16 %v386, %v385
        %vm391 = vcmask 261120
        %v393 = vsel %vm391, %v374, 0
        %395 = vmatprep.subr.bf16.mxu0 0
        %396 = vmatpush1.bf16.msra.mxu0 0
        %397 = vmatprep.subr.bf16.mxu0 0
        %398 = vmatpush1.bf16.msra.mxu0 0
        %399 = vmatprep.subr.bf16.mxu0 0
        %400 = vmatpush1.bf16.msra.mxu0 0
        %401 = vmatprep.subr.bf16.mxu0 0
        %402 = vmatpush1.bf16.msra.mxu0 0
        %403 = vmatprep.subr.bf16.mxu0 0
        %404 = vmatpush1.bf16.msra.mxu0 0
        %405 = vmatprep.subr.bf16.mxu0 0
        %406 = vmatpush1.bf16.msra.mxu0 0
        %407 = vmatprep.subr.bf16.mxu0 0
        %408 = vmatpush1.bf16.msra.mxu0 %v388
        %409 = vmatprep.subr.bf16.mxu0 0
        %410 = vmatpush1.bf16.msra.mxu0 %v387
        %411 = vmatprep.subr.bf16.mxu0 0
        %412 = vmatpush2.bf16.msra.mxu0 0
        %413 = vmatprep.subr.bf16.mxu0 0
        %414 = vmatpush2.bf16.msra.mxu0 0
        %415 = vmatprep.subr.bf16.mxu0 0
        %416 = vmatpush2.bf16.msra.mxu0 0
        %417 = vmatprep.subr.bf16.mxu0 0
        %418 = vmatpush2.bf16.msra.mxu0 0
        %419 = vmatprep.subr.bf16.mxu0 0
        %420 = vmatpush2.bf16.msra.mxu0 0
        %421 = vmatprep.subr.bf16.mxu0 0
        %422 = vmatpush2.bf16.msra.mxu0 0
        %423 = vmatprep.subr.bf16.mxu0 0
        %424 = vmatpush2.bf16.msra.mxu0 0
        %425 = vmatprep.subr.bf16.mxu0 0
        %426 = vmatpush2.bf16.msra.mxu0 0
        %427 = vmatprep.mubr.bf16.mxu0 0
        %428 = vmatmul.mubr.bf16.gmra.mxu0 %v393
        %v429 = vpop.f32.mrf.mxu0
        %v430 = vadd.f32 %v378, %v429
        %v431 = vpop.f32.mrf.mxu0
        %v432 = vpop.f32.mrf.mxu0
        %v433 = vpop.f32.mrf.mxu0
        %434 = vdwg.mxu0
        %v435 = vpack.c.bf16 %v430, %v430
        %437 = vrot.lane.b32.xlu0 %v435, 96
        %v438 = vpop.permute.xlu0 %437
        %vm439 = vcmask 64512
        %v441 = vsel %vm439, %v435, 0
        %v444 = vsel %vm439, %v438, 0
        %446 = vmatprep.subr.bf16.mxu0 0
        %447 = vmatpush1.bf16.xpose.msra.mxu0 0
        %448 = vmatprep.subr.bf16.mxu0 0
        %449 = vmatpush1.bf16.xpose.msra.mxu0 0
        %450 = vmatprep.subr.bf16.mxu0 0
        %451 = vmatpush1.bf16.xpose.msra.mxu0 0
        %452 = vmatprep.subr.bf16.mxu0 0
        %453 = vmatpush1.bf16.xpose.msra.mxu0 0
        %454 = vmatprep.subr.bf16.mxu0 0
        %455 = vmatpush1.bf16.xpose.msra.mxu0 0
        %456 = vmatprep.subr.bf16.mxu0 0
        %457 = vmatpush1.bf16.xpose.msra.mxu0 0
        %458 = vmatprep.subr.bf16.mxu0 0
        %459 = vmatpush1.bf16.xpose.msra.mxu0 0
        %460 = vmatprep.subr.bf16.mxu0 0
        %461 = vmatpush1.bf16.xpose.msra.mxu0 %v444
        %462 = vmatprep.subr.bf16.mxu0 0
        %463 = vmatpush2.bf16.xpose.msra.mxu0 0
        %464 = vmatprep.subr.bf16.mxu0 0
        %465 = vmatpush2.bf16.xpose.msra.mxu0 0
        %466 = vmatprep.subr.bf16.mxu0 0
        %467 = vmatpush2.bf16.xpose.msra.mxu0 0
        %468 = vmatprep.subr.bf16.mxu0 0
        %469 = vmatpush2.bf16.xpose.msra.mxu0 0
        %470 = vmatprep.subr.bf16.mxu0 0
        %471 = vmatpush2.bf16.xpose.msra.mxu0 0
        %472 = vmatprep.subr.bf16.mxu0 0
        %473 = vmatpush2.bf16.xpose.msra.mxu0 0
        %474 = vmatprep.subr.bf16.mxu0 0
        %475 = vmatpush2.bf16.xpose.msra.mxu0 0
        %476 = vmatprep.subr.bf16.mxu0 0
        %477 = vmatpush2.bf16.xpose.msra.mxu0 0
        %478 = vmatprep.mubr.bf16.mxu0 0
        %479 = vmatmul.mubr.bf16.gmra.mxu0 %v441
        %v480 = vpop.f32.mrf.mxu0
        %v481 = vadd.f32 %v280, %v480
        %v482 = vpop.f32.mrf.mxu0
        %v483 = vpop.f32.mrf.mxu0
        %v484 = vpop.f32.mrf.mxu0
        %485 = vdwg.mxu0
        %v486 = vsel %vm439, %v481, -inf
        %487 = vmax.xlane.f32.xlu0 %v486
        %v488 = vpop.xlane.xlu0 %487
        %v489 = vsub.f32 %v481, %v488
        %v490 = vmul.f32 %v489, 1.442695
        %v491 = vpow.pop %v490
        %v492 = vsel %vm439, %v491, 0.0
        %493 = vadd.xlane.f32.xlu0 %v492
        %v494 = vpop.xlane.xlu0 %493
        %v495 = vrcp.pop %v494
        %v496 = vmul.f32 %v491, %v495
        %v497 = vpack.c.bf16 %v496, %v496
        %498 = vrot.lane.b32.xlu0 %v435, 64
        %v499 = vpop.permute.xlu0 %498
        %v501 = vsel %vm439, %v497, 0
        %vm503 = vcmask 1043456
        %v505 = vsel %vm503, %v499, 0
        %507 = vmatprep.subr.bf16.mxu0 0
        %508 = vmatpush1.bf16.msra.mxu0 0
        %509 = vmatprep.subr.bf16.mxu0 0
        %510 = vmatpush1.bf16.msra.mxu0 0
        %511 = vmatprep.subr.bf16.mxu0 0
        %512 = vmatpush1.bf16.msra.mxu0 0
        %513 = vmatprep.subr.bf16.mxu0 0
        %514 = vmatpush1.bf16.msra.mxu0 0
        %515 = vmatprep.subr.bf16.mxu0 0
        %516 = vmatpush1.bf16.msra.mxu0 0
        %517 = vmatprep.subr.bf16.mxu0 0
        %518 = vmatpush1.bf16.msra.mxu0 0
        %519 = vmatprep.subr.bf16.mxu0 0
        %520 = vmatpush1.bf16.msra.mxu0 0
        %521 = vmatprep.subr.bf16.mxu0 0
        %522 = vmatpush1.bf16.msra.mxu0 %v505
        %523 = vmatprep.subr.bf16.mxu0 0
        %524 = vmatpush2.bf16.msra.mxu0 0
        %525 = vmatprep.subr.bf16.mxu0 0
        %526 = vmatpush2.bf16.msra.mxu0 0
        %527 = vmatprep.subr.bf16.mxu0 0
        %528 = vmatpush2.bf16.msra.mxu0 0
        %529 = vmatprep.subr.bf16.mxu0 0
        %530 = vmatpush2.bf16.msra.mxu0 0
        %531 = vmatprep.subr.bf16.mxu0 0
        %532 = vmatpush2.bf16.msra.mxu0 0
        %533 = vmatprep.subr.bf16.mxu0 0
        %534 = vmatpush2.bf16.msra.mxu0 0
        %535 = vmatprep.subr.bf16.mxu0 0
        %536 = vmatpush2.bf16.msra.mxu0 0
        %537 = vmatprep.subr.bf16.mxu0 0
        %538 = vmatpush2.bf16.msra.mxu0 0
        %539 = vmatprep.mubr.bf16.mxu0 0
        %540 = vmatmul.mubr.bf16.gmra.mxu0 %v501
        %v541 = vpop.f32.mrf.mxu0
        %v542 = vadd.f32 0.0, %v541
        %v543 = vpop.f32.mrf.mxu0
        %v544 = vpop.f32.mrf.mxu0
        %v545 = vpop.f32.mrf.mxu0
        %546 = vdwg.mxu0
        %547 = vst.msk [vmem:[#allocation2] sm:$0xff] %vm439, %v542
        %548 = vrot.lane.b32.xlu0 %v435, 120
        %v549 = vpop.permute.xlu0 %548
        %550 = vrot.lane.b32.xlu0 %v435, 88
        %v551 = vpop.permute.xlu0 %550
        %v553 = vsel %vm439, %v549, 0
        %v556 = vsel %vm439, %v551, 0
        %558 = vmatprep.subr.bf16.mxu0 0
        %559 = vmatpush1.bf16.xpose.msra.mxu0 0
        %560 = vmatprep.subr.bf16.mxu0 0
        %561 = vmatpush1.bf16.xpose.msra.mxu0 0
        %562 = vmatprep.subr.bf16.mxu0 0
        %563 = vmatpush1.bf16.xpose.msra.mxu0 0
        %564 = vmatprep.subr.bf16.mxu0 0
        %565 = vmatpush1.bf16.xpose.msra.mxu0 0
        %566 = vmatprep.subr.bf16.mxu0 0
        %567 = vmatpush1.bf16.xpose.msra.mxu0 0
        %568 = vmatprep.subr.bf16.mxu0 0
        %569 = vmatpush1.bf16.xpose.msra.mxu0 0
        %570 = vmatprep.subr.bf16.mxu0 0
        %571 = vmatpush1.bf16.xpose.msra.mxu0 0
        %572 = vmatprep.subr.bf16.mxu0 0
        %573 = vmatpush1.bf16.xpose.msra.mxu0 %v556
        %574 = vmatprep.subr.bf16.mxu0 0
        %575 = vmatpush2.bf16.xpose.msra.mxu0 0
        %576 = vmatprep.subr.bf16.mxu0 0
        %577 = vmatpush2.bf16.xpose.msra.mxu0 0
        %578 = vmatprep.subr.bf16.mxu0 0
        %579 = vmatpush2.bf16.xpose.msra.mxu0 0
        %580 = vmatprep.subr.bf16.mxu0 0
        %581 = vmatpush2.bf16.xpose.msra.mxu0 0
        %582 = vmatprep.subr.bf16.mxu0 0
        %583 = vmatpush2.bf16.xpose.msra.mxu0 0
        %584 = vmatprep.subr.bf16.mxu0 0
        %585 = vmatpush2.bf16.xpose.msra.mxu0 0
        %586 = vmatprep.subr.bf16.mxu0 0
        %587 = vmatpush2.bf16.xpose.msra.mxu0 0
        %588 = vmatprep.subr.bf16.mxu0 0
        %589 = vmatpush2.bf16.xpose.msra.mxu0 0
        %590 = vmatprep.mubr.bf16.mxu0 0
        %591 = vmatmul.mubr.bf16.gmra.mxu0 %v553
        %v592 = vpop.f32.mrf.mxu0
        %v593 = vadd.f32 %v280, %v592
        %v594 = vpop.f32.mrf.mxu0
        %v595 = vpop.f32.mrf.mxu0
        %v596 = vpop.f32.mrf.mxu0
        %597 = vdwg.mxu0
        %v598 = vsel %vm439, %v593, -inf
        %599 = vmax.xlane.f32.xlu0 %v598
        %v600 = vpop.xlane.xlu0 %599
        %v601 = vsub.f32 %v593, %v600
        %v602 = vmul.f32 %v601, 1.442695
        %v603 = vpow.pop %v602
        %v604 = vsel %vm439, %v603, 0.0
        %605 = vadd.xlane.f32.xlu0 %v604
        %v606 = vpop.xlane.xlu0 %605
        %v607 = vrcp.pop %v606
        %v608 = vmul.f32 %v603, %v607
        %v609 = vpack.c.bf16 %v608, %v608
        %610 = vrot.lane.b32.xlu0 %v435, 56
        %v611 = vpop.permute.xlu0 %610
        %v613 = vsel %vm439, %v609, 0
        %v616 = vsel %vm503, %v611, 0
        %618 = vmatprep.subr.bf16.mxu0 0
        %619 = vmatpush1.bf16.msra.mxu0 0
        %620 = vmatprep.subr.bf16.mxu0 0
        %621 = vmatpush1.bf16.msra.mxu0 0
        %622 = vmatprep.subr.bf16.mxu0 0
        %623 = vmatpush1.bf16.msra.mxu0 0
        %624 = vmatprep.subr.bf16.mxu0 0
        %625 = vmatpush1.bf16.msra.mxu0 0
        %626 = vmatprep.subr.bf16.mxu0 0
        %627 = vmatpush1.bf16.msra.mxu0 0
        %628 = vmatprep.subr.bf16.mxu0 0
        %629 = vmatpush1.bf16.msra.mxu0 0
        %630 = vmatprep.subr.bf16.mxu0 0
        %631 = vmatpush1.bf16.msra.mxu0 0
        %632 = vmatprep.subr.bf16.mxu0 0
        %633 = vmatpush1.bf16.msra.mxu0 %v616
        %634 = vmatprep.subr.bf16.mxu0 0
        %635 = vmatpush2.bf16.msra.mxu0 0
        %636 = vmatprep.subr.bf16.mxu0 0
        %637 = vmatpush2.bf16.msra.mxu0 0
        %638 = vmatprep.subr.bf16.mxu0 0
        %639 = vmatpush2.bf16.msra.mxu0 0
        %640 = vmatprep.subr.bf16.mxu0 0
        %641 = vmatpush2.bf16.msra.mxu0 0
        %642 = vmatprep.subr.bf16.mxu0 0
        %643 = vmatpush2.bf16.msra.mxu0 0
        %644 = vmatprep.subr.bf16.mxu0 0
        %645 = vmatpush2.bf16.msra.mxu0 0
        %646 = vmatprep.subr.bf16.mxu0 0
        %647 = vmatpush2.bf16.msra.mxu0 0
        %648 = vmatprep.subr.bf16.mxu0 0
        %649 = vmatpush2.bf16.msra.mxu0 0
        %650 = vmatprep.mubr.bf16.mxu0 0
        %651 = vmatmul.mubr.bf16.gmra.mxu0 %v613
        %v652 = vpop.f32.mrf.mxu0
        %v653 = vadd.f32 0.0, %v652
        %v654 = vpop.f32.mrf.mxu0
        %v655 = vpop.f32.mrf.mxu0
        %v656 = vpop.f32.mrf.mxu0
        %657 = vdwg.mxu0
        %659 = vrot.lane.b32.xlu0 %v653, 8
        %v660 = vpop.permute.xlu0 %659
        %vm662 = vcmask 130112
        %663 = vst.msk [vmem:[#allocation2] sm:$0xff] %vm662, %v660
        %664 = vrot.lane.b32.xlu0 %v435, 112
        %v665 = vpop.permute.xlu0 %664
        %666 = vrot.lane.b32.xlu0 %v435, 80
        %v667 = vpop.permute.xlu0 %666
        %v669 = vsel %vm439, %v665, 0
        %v672 = vsel %vm439, %v667, 0
        %674 = vmatprep.subr.bf16.mxu0 0
        %675 = vmatpush1.bf16.xpose.msra.mxu0 0
        %676 = vmatprep.subr.bf16.mxu0 0
        %677 = vmatpush1.bf16.xpose.msra.mxu0 0
        %678 = vmatprep.subr.bf16.mxu0 0
        %679 = vmatpush1.bf16.xpose.msra.mxu0 0
        %680 = vmatprep.subr.bf16.mxu0 0
        %681 = vmatpush1.bf16.xpose.msra.mxu0 0
        %682 = vmatprep.subr.bf16.mxu0 0
        %683 = vmatpush1.bf16.xpose.msra.mxu0 0
        %684 = vmatprep.subr.bf16.mxu0 0
        %685 = vmatpush1.bf16.xpose.msra.mxu0 0
        %686 = vmatprep.subr.bf16.mxu0 0
        %687 = vmatpush1.bf16.xpose.msra.mxu0 0
        %688 = vmatprep.subr.bf16.mxu0 0
        %689 = vmatpush1.bf16.xpose.msra.mxu0 %v672
        %690 = vmatprep.subr.bf16.mxu0 0
        %691 = vmatpush2.bf16.xpose.msra.mxu0 0
        %692 = vmatprep.subr.bf16.mxu0 0
        %693 = vmatpush2.bf16.xpose.msra.mxu0 0
        %694 = vmatprep.subr.bf16.mxu0 0
        %695 = vmatpush2.bf16.xpose.msra.mxu0 0
        %696 = vmatprep.subr.bf16.mxu0 0
        %697 = vmatpush2.bf16.xpose.msra.mxu0 0
        %698 = vmatprep.subr.bf16.mxu0 0
        %699 = vmatpush2.bf16.xpose.msra.mxu0 0
        %700 = vmatprep.subr.bf16.mxu0 0
        %701 = vmatpush2.bf16.xpose.msra.mxu0 0
        %702 = vmatprep.subr.bf16.mxu0 0
        %703 = vmatpush2.bf16.xpose.msra.mxu0 0
        %704 = vmatprep.subr.bf16.mxu0 0
        %705 = vmatpush2.bf16.xpose.msra.mxu0 0
        %706 = vmatprep.mubr.bf16.mxu0 0
        %707 = vmatmul.mubr.bf16.gmra.mxu0 %v669
        %v708 = vpop.f32.mrf.mxu0
        %v709 = vadd.f32 %v280, %v708
        %v710 = vpop.f32.mrf.mxu0
        %v711 = vpop.f32.mrf.mxu0
        %v712 = vpop.f32.mrf.mxu0
        %713 = vdwg.mxu0
        %v714 = vsel %vm439, %v709, -inf
        %715 = vmax.xlane.f32.xlu0 %v714
        %v716 = vpop.xlane.xlu0 %715
        %v717 = vsub.f32 %v709, %v716
        %v718 = vmul.f32 %v717, 1.442695
        %v719 = vpow.pop %v718
        %v720 = vsel %vm439, %v719, 0.0
        %721 = vadd.xlane.f32.xlu0 %v720
        %v722 = vpop.xlane.xlu0 %721
        %v723 = vrcp.pop %v722
        %v724 = vmul.f32 %v719, %v723
        %v725 = vpack.c.bf16 %v724, %v724
        %726 = vrot.lane.b32.xlu0 %v435, 48
        %v727 = vpop.permute.xlu0 %726
        %v729 = vsel %vm439, %v725, 0
        %v732 = vsel %vm503, %v727, 0
        %734 = vmatprep.subr.bf16.mxu0 0
        %735 = vmatpush1.bf16.msra.mxu0 0
        %736 = vmatprep.subr.bf16.mxu0 0
        %737 = vmatpush1.bf16.msra.mxu0 0
        %738 = vmatprep.subr.bf16.mxu0 0
        %739 = vmatpush1.bf16.msra.mxu0 0
        %740 = vmatprep.subr.bf16.mxu0 0
        %741 = vmatpush1.bf16.msra.mxu0 0
        %742 = vmatprep.subr.bf16.mxu0 0
        %743 = vmatpush1.bf16.msra.mxu0 0
        %744 = vmatprep.subr.bf16.mxu0 0
        %745 = vmatpush1.bf16.msra.mxu0 0
        %746 = vmatprep.subr.bf16.mxu0 0
        %747 = vmatpush1.bf16.msra.mxu0 0
        %748 = vmatprep.subr.bf16.mxu0 0
        %749 = vmatpush1.bf16.msra.mxu0 %v732
        %750 = vmatprep.subr.bf16.mxu0 0
        %751 = vmatpush2.bf16.msra.mxu0 0
        %752 = vmatprep.subr.bf16.mxu0 0
        %753 = vmatpush2.bf16.msra.mxu0 0
        %754 = vmatprep.subr.bf16.mxu0 0
        %755 = vmatpush2.bf16.msra.mxu0 0
        %756 = vmatprep.subr.bf16.mxu0 0
        %757 = vmatpush2.bf16.msra.mxu0 0
        %758 = vmatprep.subr.bf16.mxu0 0
        %759 = vmatpush2.bf16.msra.mxu0 0
        %760 = vmatprep.subr.bf16.mxu0 0
        %761 = vmatpush2.bf16.msra.mxu0 0
        %762 = vmatprep.subr.bf16.mxu0 0
        %763 = vmatpush2.bf16.msra.mxu0 0
        %764 = vmatprep.subr.bf16.mxu0 0
        %765 = vmatpush2.bf16.msra.mxu0 0
        %766 = vmatprep.mubr.bf16.mxu0 0
        %767 = vmatmul.mubr.bf16.gmra.mxu0 %v729
        %v768 = vpop.f32.mrf.mxu0
        %v769 = vadd.f32 0.0, %v768
        %v770 = vpop.f32.mrf.mxu0
        %v771 = vpop.f32.mrf.mxu0
        %v772 = vpop.f32.mrf.mxu0
        %773 = vdwg.mxu0
        %775 = vrot.lane.b32.xlu0 %v769, 16
        %v776 = vpop.permute.xlu0 %775
        %vm778 = vcmask 195712
        %779 = vst.msk [vmem:[#allocation2] sm:$0xff] %vm778, %v776
        %780 = vrot.lane.b32.xlu0 %v435, 104
        %v781 = vpop.permute.xlu0 %780
        %782 = vrot.lane.b32.xlu0 %v435, 72
        %v783 = vpop.permute.xlu0 %782
        %v785 = vsel %vm439, %v781, 0
        %v788 = vsel %vm439, %v783, 0
        %790 = vmatprep.subr.bf16.mxu0 0
        %791 = vmatpush1.bf16.xpose.msra.mxu0 0
        %792 = vmatprep.subr.bf16.mxu0 0
        %793 = vmatpush1.bf16.xpose.msra.mxu0 0
        %794 = vmatprep.subr.bf16.mxu0 0
        %795 = vmatpush1.bf16.xpose.msra.mxu0 0
        %796 = vmatprep.subr.bf16.mxu0 0
        %797 = vmatpush1.bf16.xpose.msra.mxu0 0
        %798 = vmatprep.subr.bf16.mxu0 0
        %799 = vmatpush1.bf16.xpose.msra.mxu0 0
        %800 = vmatprep.subr.bf16.mxu0 0
        %801 = vmatpush1.bf16.xpose.msra.mxu0 0
        %802 = vmatprep.subr.bf16.mxu0 0
        %803 = vmatpush1.bf16.xpose.msra.mxu0 0
        %804 = vmatprep.subr.bf16.mxu0 0
        %805 = vmatpush1.bf16.xpose.msra.mxu0 %v788
        %806 = vmatprep.subr.bf16.mxu0 0
        %807 = vmatpush2.bf16.xpose.msra.mxu0 0
        %808 = vmatprep.subr.bf16.mxu0 0
        %809 = vmatpush2.bf16.xpose.msra.mxu0 0
        %810 = vmatprep.subr.bf16.mxu0 0
        %811 = vmatpush2.bf16.xpose.msra.mxu0 0
        %812 = vmatprep.subr.bf16.mxu0 0
        %813 = vmatpush2.bf16.xpose.msra.mxu0 0
        %814 = vmatprep.subr.bf16.mxu0 0
        %815 = vmatpush2.bf16.xpose.msra.mxu0 0
        %816 = vmatprep.subr.bf16.mxu0 0
        %817 = vmatpush2.bf16.xpose.msra.mxu0 0
        %818 = vmatprep.subr.bf16.mxu0 0
        %819 = vmatpush2.bf16.xpose.msra.mxu0 0
        %820 = vmatprep.subr.bf16.mxu0 0
        %821 = vmatpush2.bf16.xpose.msra.mxu0 0
        %822 = vmatprep.mubr.bf16.mxu0 0
        %823 = vmatmul.mubr.bf16.gmra.mxu0 %v785
        %v824 = vpop.f32.mrf.mxu0
        %v825 = vadd.f32 %v280, %v824
        %v826 = vpop.f32.mrf.mxu0
        %v827 = vpop.f32.mrf.mxu0
        %v828 = vpop.f32.mrf.mxu0
        %829 = vdwg.mxu0
        %v830 = vsel %vm439, %v825, -inf
        %831 = vmax.xlane.f32.xlu0 %v830
        %v832 = vpop.xlane.xlu0 %831
        %v833 = vsub.f32 %v825, %v832
        %v834 = vmul.f32 %v833, 1.442695
        %v835 = vpow.pop %v834
        %v836 = vsel %vm439, %v835, 0.0
        %837 = vadd.xlane.f32.xlu0 %v836
        %v838 = vpop.xlane.xlu0 %837
        %v839 = vrcp.pop %v838
        %v840 = vmul.f32 %v835, %v839
        %v841 = vpack.c.bf16 %v840, %v840
        %842 = vrot.lane.b32.xlu0 %v435, 40
        %v843 = vpop.permute.xlu0 %842
        %v845 = vsel %vm439, %v841, 0
        %v848 = vsel %vm503, %v843, 0
        %850 = vmatprep.subr.bf16.mxu0 0
        %851 = vmatpush1.bf16.msra.mxu0 0
        %852 = vmatprep.subr.bf16.mxu0 0
        %853 = vmatpush1.bf16.msra.mxu0 0
        %854 = vmatprep.subr.bf16.mxu0 0
        %855 = vmatpush1.bf16.msra.mxu0 0
        %856 = vmatprep.subr.bf16.mxu0 0
        %857 = vmatpush1.bf16.msra.mxu0 0
        %858 = vmatprep.subr.bf16.mxu0 0
        %859 = vmatpush1.bf16.msra.mxu0 0
        %860 = vmatprep.subr.bf16.mxu0 0
        %861 = vmatpush1.bf16.msra.mxu0 0
        %862 = vmatprep.subr.bf16.mxu0 0
        %863 = vmatpush1.bf16.msra.mxu0 0
        %864 = vmatprep.subr.bf16.mxu0 0
        %865 = vmatpush1.bf16.msra.mxu0 %v848
        %866 = vmatprep.subr.bf16.mxu0 0
        %867 = vmatpush2.bf16.msra.mxu0 0
        %868 = vmatprep.subr.bf16.mxu0 0
        %869 = vmatpush2.bf16.msra.mxu0 0
        %870 = vmatprep.subr.bf16.mxu0 0
        %871 = vmatpush2.bf16.msra.mxu0 0
        %872 = vmatprep.subr.bf16.mxu0 0
        %873 = vmatpush2.bf16.msra.mxu0 0
        %874 = vmatprep.subr.bf16.mxu0 0
        %875 = vmatpush2.bf16.msra.mxu0 0
        %876 = vmatprep.subr.bf16.mxu0 0
        %877 = vmatpush2.bf16.msra.mxu0 0
        %878 = vmatprep.subr.bf16.mxu0 0
        %879 = vmatpush2.bf16.msra.mxu0 0
        %880 = vmatprep.subr.bf16.mxu0 0
        %881 = vmatpush2.bf16.msra.mxu0 0
        %882 = vmatprep.mubr.bf16.mxu0 0
        %883 = vmatmul.mubr.bf16.gmra.mxu0 %v845
        %v884 = vpop.f32.mrf.mxu0
        %v885 = vadd.f32 0.0, %v884
        %v886 = vpop.f32.mrf.mxu0
        %v887 = vpop.f32.mrf.mxu0
        %v888 = vpop.f32.mrf.mxu0
        %889 = vdwg.mxu0
        %891 = vrot.lane.b32.xlu0 %v885, 24
        %v892 = vpop.permute.xlu0 %891
        %vm894 = vcmask 261312
        %895 = vst.msk [vmem:[#allocation2] sm:$0xff] %vm894, %v892
        %v896 = vld [vmem:[#allocation2] sm:$0xff]
        %v897 = vpack.c.bf16 %v896, %v896
        %v898 = vlaneseq
        %v899 = vshrl.u32 %v898, 7
        %v900 = vsub.s32 0, %v899
        %v901 = vrot.slane %v271, %v900
        %v906 = vunpack.c.l.b16 %v248
        %v907 = vunpack.c.l.b16 %v249
        %v908 = vunpack.c.l.b16 %v250
        %v909 = vunpack.c.l.b16 %v251
        %v910 = vpack.c.b16 %v907, %v906
        %v911 = vpack.c.b16 %v909, %v908
        %v915 = vsel %vm391, %v897, 0
        %917 = vmatprep.subr.bf16.mxu0 0
        %918 = vmatpush1.bf16.msra.mxu0 0
        %919 = vmatprep.subr.bf16.mxu0 0
        %920 = vmatpush1.bf16.msra.mxu0 0
        %921 = vmatprep.subr.bf16.mxu0 0
        %922 = vmatpush1.bf16.msra.mxu0 0
        %923 = vmatprep.subr.bf16.mxu0 0
        %924 = vmatpush1.bf16.msra.mxu0 0
        %925 = vmatprep.subr.bf16.mxu0 0
        %926 = vmatpush1.bf16.msra.mxu0 0
        %927 = vmatprep.subr.bf16.mxu0 0
        %928 = vmatpush1.bf16.msra.mxu0 0
        %929 = vmatprep.subr.bf16.mxu0 0
        %930 = vmatpush1.bf16.msra.mxu0 %v911
        %931 = vmatprep.subr.bf16.mxu0 0
        %932 = vmatpush1.bf16.msra.mxu0 %v910
        %933 = vmatprep.subr.bf16.mxu0 0
        %934 = vmatpush2.bf16.msra.mxu0 0
        %935 = vmatprep.subr.bf16.mxu0 0
        %936 = vmatpush2.bf16.msra.mxu0 0
        %937 = vmatprep.subr.bf16.mxu0 0
        %938 = vmatpush2.bf16.msra.mxu0 0
        %939 = vmatprep.subr.bf16.mxu0 0
        %940 = vmatpush2.bf16.msra.mxu0 0
        %941 = vmatprep.subr.bf16.mxu0 0
        %942 = vmatpush2.bf16.msra.mxu0 0
        %943 = vmatprep.subr.bf16.mxu0 0
        %944 = vmatpush2.bf16.msra.mxu0 0
        %945 = vmatprep.subr.bf16.mxu0 0
        %946 = vmatpush2.bf16.msra.mxu0 0
        %947 = vmatprep.subr.bf16.mxu0 0
        %948 = vmatpush2.bf16.msra.mxu0 0
        %949 = vmatprep.mubr.bf16.mxu0 0
        %950 = vmatmul.mubr.bf16.gmra.mxu0 %v915
        %v951 = vpop.f32.mrf.mxu0
        %v952 = vadd.f32 %v901, %v951
        %v953 = vpop.f32.mrf.mxu0
        %v954 = vpop.f32.mrf.mxu0
        %v955 = vpop.f32.mrf.mxu0
        %956 = vdwg.mxu0
        %v957 = vadd.f32 %v371, %v952
        %v958 = vsel %vm391, %v957, 0.0
        %959 = vadd.xlane.f32.xlu0 %v958
        %v960 = vpop.xlane.xlu0 %959
        %v961 = vrcp.pop 32.0
        %v962 = vmul.f32 %v960, %v961
        %v963 = vsub.f32 %v957, %v962
        %v964 = vmul.f32 %v963, %v963
        %v965 = vsel %vm391, %v964, 0.0
        %966 = vadd.xlane.f32.xlu0 %v965
        %v967 = vpop.xlane.xlu0 %966
        %v968 = vmul.f32 %v967, %v961
        %v969 = vadd.f32 %v968, 1e-05
        %v970 = vrsqrt.pop %v969
        %v971 = vmul.f32 %v963, %v970
        %v972 = vlaneseq
        %v973 = vshrl.u32 %v972, 7
        %v974 = vsub.s32 0, %v973
        %v975 = vrot.slane %v275, %v974
        %v976 = vmul.f32 %v971, %v975
        %v977 = vlaneseq
        %v978 = vshrl.u32 %v977, 7
        %v979 = vsub.s32 0, %v978
        %v980 = vrot.slane %v276, %v979
        %v981 = vadd.f32 %v976, %v980
        %v982 = vpack.c.bf16 %v981, %v981
        %v983 = vlaneseq
        %v984 = vshrl.u32 %v983, 7
        %v985 = vsub.s32 0, %v984
        %v986 = vrot.slane %v270, %v985
        %v991 = vunpack.c.l.b16 %v252
        %v992 = vunpack.c.l.b16 %v253
        %v993 = vunpack.c.l.b16 %v254
        %v994 = vunpack.c.l.b16 %v255
        %v995 = vpack.c.b16 %v992, %v991
        %v996 = vpack.c.b16 %v994, %v993
        %v1000 = vsel %vm391, %v982, 0
        %1002 = vmatprep.subr.bf16.mxu0 0
        %1003 = vmatpush1.bf16.msra.mxu0 0
        %1004 = vmatprep.subr.bf16.mxu0 0
        %1005 = vmatpush1.bf16.msra.mxu0 0
        %1006 = vmatprep.subr.bf16.mxu0 0
        %1007 = vmatpush1.bf16.msra.mxu0 0
        %1008 = vmatprep.subr.bf16.mxu0 0
        %1009 = vmatpush1.bf16.msra.mxu0 0
        %1010 = vmatprep.subr.bf16.mxu0 0
        %1011 = vmatpush1.bf16.msra.mxu0 0
        %1012 = vmatprep.subr.bf16.mxu0 0
        %1013 = vmatpush1.bf16.msra.mxu0 0
        %1014 = vmatprep.subr.bf16.mxu0 0
        %1015 = vmatpush1.bf16.msra.mxu0 %v996
        %1016 = vmatprep.subr.bf16.mxu0 0
        %1017 = vmatpush1.bf16.msra.mxu0 %v995
        %1018 = vmatprep.subr.bf16.mxu0 0
        %1019 = vmatpush2.bf16.msra.mxu0 0
        %1020 = vmatprep.subr.bf16.mxu0 0
        %1021 = vmatpush2.bf16.msra.mxu0 0
        %1022 = vmatprep.subr.bf16.mxu0 0
        %1023 = vmatpush2.bf16.msra.mxu0 0
        %1024 = vmatprep.subr.bf16.mxu0 0
        %1025 = vmatpush2.bf16.msra.mxu0 0
        %1026 = vmatprep.subr.bf16.mxu0 0
        %1027 = vmatpush2.bf16.msra.mxu0 0
        %1028 = vmatprep.subr.bf16.mxu0 0
        %1029 = vmatpush2.bf16.msra.mxu0 0
        %1030 = vmatprep.subr.bf16.mxu0 0
        %1031 = vmatpush2.bf16.msra.mxu0 0
        %1032 = vmatprep.subr.bf16.mxu0 0
        %1033 = vmatpush2.bf16.msra.mxu0 0
        %1034 = vmatprep.mubr.bf16.mxu0 0
        %1035 = vmatmul.mubr.bf16.gmra.mxu0 %v1000
        %v1036 = vpop.f32.mrf.mxu0
        %v1037 = vadd.f32 %v986, %v1036
        %v1038 = vpop.f32.mrf.mxu0
        %v1039 = vpop.f32.mrf.mxu0
        %v1040 = vpop.f32.mrf.mxu0
        %1041 = vdwg.mxu0
        %v1042 = vlaneseq
        %v1043 = vshrl.u32 %v1042, 7
        %v1044 = vsub.s32 0, %v1043
        %v1045 = vrot.slane %v269, %v1044
        %v1050 = vunpack.c.l.b16 %v244
        %v1051 = vunpack.c.h.b16 %v244
        %v1052 = vunpack.c.l.b16 %v245
        %v1053 = vunpack.c.h.b16 %v245
        %v1054 = vunpack.c.l.b16 %v246
        %v1055 = vunpack.c.h.b16 %v246
        %v1056 = vunpack.c.l.b16 %v247
        %v1057 = vunpack.c.h.b16 %v247
        %v1058 = vpack.c.b16 %v1052, %v1050
        %v1059 = vpack.c.b16 %v1053, %v1051
        %v1060 = vpack.c.b16 %v1056, %v1054
        %v1061 = vpack.c.b16 %v1057, %v1055
        %1062 = vrot.lane.b32.xlu0 %v1058, 32
        %v1063 = vpop.permute.xlu0 %1062
        %1064 = vrot.lane.b32.xlu0 %v1059, 32
        %v1065 = vpop.permute.xlu0 %1064
        %1066 = vrot.lane.b32.xlu0 %v1060, 32
        %v1067 = vpop.permute.xlu0 %1066
        %1068 = vrot.lane.b32.xlu0 %v1061, 32
        %v1069 = vpop.permute.xlu0 %1068
        %vm1070 = vcmask 261120
        %v1071 = vsel %vm1070, %v1063, %v1065
        %v1072 = vsel %vm1070, %v1067, %v1069
        %v1076 = vsel %vm391, %v239, 0
        %1078 = vmatprep.subr.bf16.mxu0 0
        %1079 = vmatpush1.bf16.msra.mxu0 0
        %1080 = vmatprep.subr.bf16.mxu0 0
        %1081 = vmatpush1.bf16.msra.mxu0 0
        %1082 = vmatprep.subr.bf16.mxu0 0
        %1083 = vmatpush1.bf16.msra.mxu0 0
        %1084 = vmatprep.subr.bf16.mxu0 0
        %1085 = vmatpush1.bf16.msra.mxu0 0
        %1086 = vmatprep.subr.bf16.mxu0 0
        %1087 = vmatpush1.bf16.msra.mxu0 0
        %1088 = vmatprep.subr.bf16.mxu0 0
        %1089 = vmatpush1.bf16.msra.mxu0 0
        %1090 = vmatprep.subr.bf16.mxu0 0
        %1091 = vmatpush1.bf16.msra.mxu0 %v1072
        %1092 = vmatprep.subr.bf16.mxu0 0
        %1093 = vmatpush1.bf16.msra.mxu0 %v1071
        %1094 = vmatprep.subr.bf16.mxu0 0
        %1095 = vmatpush2.bf16.msra.mxu0 0
        %1096 = vmatprep.subr.bf16.mxu0 0
        %1097 = vmatpush2.bf16.msra.mxu0 0
        %1098 = vmatprep.subr.bf16.mxu0 0
        %1099 = vmatpush2.bf16.msra.mxu0 0
        %1100 = vmatprep.subr.bf16.mxu0 0
        %1101 = vmatpush2.bf16.msra.mxu0 0
        %1102 = vmatprep.subr.bf16.mxu0 0
        %1103 = vmatpush2.bf16.msra.mxu0 0
        %1104 = vmatprep.subr.bf16.mxu0 0
        %1105 = vmatpush2.bf16.msra.mxu0 0
        %1106 = vmatprep.subr.bf16.mxu0 0
        %1107 = vmatpush2.bf16.msra.mxu0 0
        %1108 = vmatprep.subr.bf16.mxu0 0
        %1109 = vmatpush2.bf16.msra.mxu0 0
        %1110 = vmatprep.mubr.bf16.mxu0 0
        %1111 = vmatmul.mubr.bf16.gmra.mxu0 %v1076
        %v1112 = vpop.f32.mrf.mxu0
        %v1113 = vadd.f32 %v1045, %v1112
        %v1114 = vpop.f32.mrf.mxu0
        %v1115 = vpop.f32.mrf.mxu0
        %v1116 = vpop.f32.mrf.mxu0
        %1117 = vdwg.mxu0
        %v1118 = vpack.c.bf16 %v1037, %v1037
        %v1119 = vpack.c.bf16 %v1113, %v1113
        %v1121 = vsel %vm439, %v1118, 0
        %v1124 = vsel %vm439, %v1119, 0
        %1126 = vmatprep.subr.bf16.mxu0 0
        %1127 = vmatpush1.bf16.xpose.msra.mxu0 0
        %1128 = vmatprep.subr.bf16.mxu0 0
        %1129 = vmatpush1.bf16.xpose.msra.mxu0 0
        %1130 = vmatprep.subr.bf16.mxu0 0
        %1131 = vmatpush1.bf16.xpose.msra.mxu0 0
        %1132 = vmatprep.subr.bf16.mxu0 0
        %1133 = vmatpush1.bf16.xpose.msra.mxu0 0
        %1134 = vmatprep.subr.bf16.mxu0 0
        %1135 = vmatpush1.bf16.xpose.msra.mxu0 0
        %1136 = vmatprep.subr.bf16.mxu0 0
        %1137 = vmatpush1.bf16.xpose.msra.mxu0 0
        %1138 = vmatprep.subr.bf16.mxu0 0
        %1139 = vmatpush1.bf16.xpose.msra.mxu0 0
        %1140 = vmatprep.subr.bf16.mxu0 0
        %1141 = vmatpush1.bf16.xpose.msra.mxu0 %v1124
        %1142 = vmatprep.subr.bf16.mxu0 0
        %1143 = vmatpush2.bf16.xpose.msra.mxu0 0
        %1144 = vmatprep.subr.bf16.mxu0 0
        %1145 = vmatpush2.bf16.xpose.msra.mxu0 0
        %1146 = vmatprep.subr.bf16.mxu0 0
        %1147 = vmatpush2.bf16.xpose.msra.mxu0 0
        %1148 = vmatprep.subr.bf16.mxu0 0
        %1149 = vmatpush2.bf16.xpose.msra.mxu0 0
        %1150 = vmatprep.subr.bf16.mxu0 0
        %1151 = vmatpush2.bf16.xpose.msra.mxu0 0
        %1152 = vmatprep.subr.bf16.mxu0 0
        %1153 = vmatpush2.bf16.xpose.msra.mxu0 0
        %1154 = vmatprep.subr.bf16.mxu0 0
        %1155 = vmatpush2.bf16.xpose.msra.mxu0 0
        %1156 = vmatprep.subr.bf16.mxu0 0
        %1157 = vmatpush2.bf16.xpose.msra.mxu0 0
        %1158 = vmatprep.mubr.bf16.mxu0 0
        %1159 = vmatmul.mubr.bf16.gmra.mxu0 %v1121
        %v1160 = vpop.f32.mrf.mxu0
        %v1161 = vadd.f32 %v280, %v1160
        %v1162 = vpop.f32.mrf.mxu0
        %v1163 = vpop.f32.mrf.mxu0
        %v1164 = vpop.f32.mrf.mxu0
        %1165 = vdwg.mxu0
        %v1166 = vsel %vm439, %v1161, -inf
        %1167 = vmax.xlane.f32.xlu0 %v1166
        %v1168 = vpop.xlane.xlu0 %1167
        %v1169 = vsub.f32 %v1161, %v1168
        %v1170 = vmul.f32 %v1169, 1.442695
        %v1171 = vpow.pop %v1170
        %v1172 = vsel %vm439, %v1171, 0.0
        %1173 = vadd.xlane.f32.xlu0 %v1172
        %v1174 = vpop.xlane.xlu0 %1173
        %v1175 = vrcp.pop %v1174
        %v1176 = vmul.f32 %v1171, %v1175
        %v1177 = vpack.c.bf16 %v1176, %v1176
        %1179 = vrot.lane.b32.xlu0 %v1119, 96
        %v1180 = vpop.permute.xlu0 %1179
        %v1182 = vsel %vm439, %v1177, 0
        %v1185 = vsel %vm503, %v1180, 0
        %1187 = vmatprep.subr.bf16.mxu0 0
        %1188 = vmatpush1.bf16.msra.mxu0 0
        %1189 = vmatprep.subr.bf16.mxu0 0
        %1190 = vmatpush1.bf16.msra.mxu0 0
        %1191 = vmatprep.subr.bf16.mxu0 0
        %1192 = vmatpush1.bf16.msra.mxu0 0
        %1193 = vmatprep.subr.bf16.mxu0 0
        %1194 = vmatpush1.bf16.msra.mxu0 0
        %1195 = vmatprep.subr.bf16.mxu0 0
        %1196 = vmatpush1.bf16.msra.mxu0 0
        %1197 = vmatprep.subr.bf16.mxu0 0
        %1198 = vmatpush1.bf16.msra.mxu0 0
        %1199 = vmatprep.subr.bf16.mxu0 0
        %1200 = vmatpush1.bf16.msra.mxu0 0
        %1201 = vmatprep.subr.bf16.mxu0 0
        %1202 = vmatpush1.bf16.msra.mxu0 %v1185
        %1203 = vmatprep.subr.bf16.mxu0 0
        %1204 = vmatpush2.bf16.msra.mxu0 0
        %1205 = vmatprep.subr.bf16.mxu0 0
        %1206 = vmatpush2.bf16.msra.mxu0 0
        %1207 = vmatprep.subr.bf16.mxu0 0
        %1208 = vmatpush2.bf16.msra.mxu0 0
        %1209 = vmatprep.subr.bf16.mxu0 0
        %1210 = vmatpush2.bf16.msra.mxu0 0
        %1211 = vmatprep.subr.bf16.mxu0 0
        %1212 = vmatpush2.bf16.msra.mxu0 0
        %1213 = vmatprep.subr.bf16.mxu0 0
        %1214 = vmatpush2.bf16.msra.mxu0 0
        %1215 = vmatprep.subr.bf16.mxu0 0
        %1216 = vmatpush2.bf16.msra.mxu0 0
        %1217 = vmatprep.subr.bf16.mxu0 0
        %1218 = vmatpush2.bf16.msra.mxu0 0
        %1219 = vmatprep.mubr.bf16.mxu0 0
        %1220 = vmatmul.mubr.bf16.gmra.mxu0 %v1182
        %v1221 = vpop.f32.mrf.mxu0
        %v1222 = vadd.f32 0.0, %v1221
        %v1223 = vpop.f32.mrf.mxu0
        %v1224 = vpop.f32.mrf.mxu0
        %v1225 = vpop.f32.mrf.mxu0
        %1226 = vdwg.mxu0
        %1227 = vst.msk [vmem:[#allocation2] sm:$0xff] %vm439, %v1222
        %1229 = vrot.lane.b32.xlu0 %v1118, 120
        %v1230 = vpop.permute.xlu0 %1229
        %1231 = vrot.lane.b32.xlu0 %v1119, 120
        %v1232 = vpop.permute.xlu0 %1231
        %v1234 = vsel %vm439, %v1230, 0
        %v1237 = vsel %vm439, %v1232, 0
        %1239 = vmatprep.subr.bf16.mxu0 0
        %1240 = vmatpush1.bf16.xpose.msra.mxu0 0
        %1241 = vmatprep.subr.bf16.mxu0 0
        %1242 = vmatpush1.bf16.xpose.msra.mxu0 0
        %1243 = vmatprep.subr.bf16.mxu0 0
        %1244 = vmatpush1.bf16.xpose.msra.mxu0 0
        %1245 = vmatprep.subr.bf16.mxu0 0
        %1246 = vmatpush1.bf16.xpose.msra.mxu0 0
        %1247 = vmatprep.subr.bf16.mxu0 0
        %1248 = vmatpush1.bf16.xpose.msra.mxu0 0
        %1249 = vmatprep.subr.bf16.mxu0 0
        %1250 = vmatpush1.bf16.xpose.msra.mxu0 0
        %1251 = vmatprep.subr.bf16.mxu0 0
        %1252 = vmatpush1.bf16.xpose.msra.mxu0 0
        %1253 = vmatprep.subr.bf16.mxu0 0
        %1254 = vmatpush1.bf16.xpose.msra.mxu0 %v1237
        %1255 = vmatprep.subr.bf16.mxu0 0
        %1256 = vmatpush2.bf16.xpose.msra.mxu0 0
        %1257 = vmatprep.subr.bf16.mxu0 0
        %1258 = vmatpush2.bf16.xpose.msra.mxu0 0
        %1259 = vmatprep.subr.bf16.mxu0 0
        %1260 = vmatpush2.bf16.xpose.msra.mxu0 0
        %1261 = vmatprep.subr.bf16.mxu0 0
        %1262 = vmatpush2.bf16.xpose.msra.mxu0 0
        %1263 = vmatprep.subr.bf16.mxu0 0
        %1264 = vmatpush2.bf16.xpose.msra.mxu0 0
        %1265 = vmatprep.subr.bf16.mxu0 0
        %1266 = vmatpush2.bf16.xpose.msra.mxu0 0
        %1267 = vmatprep.subr.bf16.mxu0 0
        %1268 = vmatpush2.bf16.xpose.msra.mxu0 0
        %1269 = vmatprep.subr.bf16.mxu0 0
        %1270 = vmatpush2.bf16.xpose.msra.mxu0 0
        %1271 = vmatprep.mubr.bf16.mxu0 0
        %1272 = vmatmul.mubr.bf16.gmra.mxu0 %v1234
        %v1273 = vpop.f32.mrf.mxu0
        %v1274 = vadd.f32 %v280, %v1273
        %v1275 = vpop.f32.mrf.mxu0
        %v1276 = vpop.f32.mrf.mxu0
        %v1277 = vpop.f32.mrf.mxu0
        %1278 = vdwg.mxu0
        %v1279 = vsel %vm439, %v1274, -inf
        %1280 = vmax.xlane.f32.xlu0 %v1279
        %v1281 = vpop.xlane.xlu0 %1280
        %v1282 = vsub.f32 %v1274, %v1281
        %v1283 = vmul.f32 %v1282, 1.442695
        %v1284 = vpow.pop %v1283
        %v1285 = vsel %vm439, %v1284, 0.0
        %1286 = vadd.xlane.f32.xlu0 %v1285
        %v1287 = vpop.xlane.xlu0 %1286
        %v1288 = vrcp.pop %v1287
        %v1289 = vmul.f32 %v1284, %v1288
        %v1290 = vpack.c.bf16 %v1289, %v1289
        %1291 = vrot.lane.b32.xlu0 %v1119, 88
        %v1292 = vpop.permute.xlu0 %1291
        %v1294 = vsel %vm439, %v1290, 0
        %v1297 = vsel %vm503, %v1292, 0
        %1299 = vmatprep.subr.bf16.mxu0 0
        %1300 = vmatpush1.bf16.msra.mxu0 0
        %1301 = vmatprep.subr.bf16.mxu0 0
        %1302 = vmatpush1.bf16.msra.mxu0 0
        %1303 = vmatprep.subr.bf16.mxu0 0
        %1304 = vmatpush1.bf16.msra.mxu0 0
        %1305 = vmatprep.subr.bf16.mxu0 0
        %1306 = vmatpush1.bf16.msra.mxu0 0
        %1307 = vmatprep.subr.bf16.mxu0 0
        %1308 = vmatpush1.bf16.msra.mxu0 0
        %1309 = vmatprep.subr.bf16.mxu0 0
        %1310 = vmatpush1.bf16.msra.mxu0 0
        %1311 = vmatprep.subr.bf16.mxu0 0
        %1312 = vmatpush1.bf16.msra.mxu0 0
        %1313 = vmatprep.subr.bf16.mxu0 0
        %1314 = vmatpush1.bf16.msra.mxu0 %v1297
        %1315 = vmatprep.subr.bf16.mxu0 0
        %1316 = vmatpush2.bf16.msra.mxu0 0
        %1317 = vmatprep.subr.bf16.mxu0 0
        %1318 = vmatpush2.bf16.msra.mxu0 0
        %1319 = vmatprep.subr.bf16.mxu0 0
        %1320 = vmatpush2.bf16.msra.mxu0 0
        %1321 = vmatprep.subr.bf16.mxu0 0
        %1322 = vmatpush2.bf16.msra.mxu0 0
        %1323 = vmatprep.subr.bf16.mxu0 0
        %1324 = vmatpush2.bf16.msra.mxu0 0
        %1325 = vmatprep.subr.bf16.mxu0 0
        %1326 = vmatpush2.bf16.msra.mxu0 0
        %1327 = vmatprep.subr.bf16.mxu0 0
        %1328 = vmatpush2.bf16.msra.mxu0 0
        %1329 = vmatprep.subr.bf16.mxu0 0
        %1330 = vmatpush2.bf16.msra.mxu0 0
        %1331 = vmatprep.mubr.bf16.mxu0 0
        %1332 = vmatmul.mubr.bf16.gmra.mxu0 %v1294
        %v1333 = vpop.f32.mrf.mxu0
        %v1334 = vadd.f32 0.0, %v1333
        %v1335 = vpop.f32.mrf.mxu0
        %v1336 = vpop.f32.mrf.mxu0
        %v1337 = vpop.f32.mrf.mxu0
        %1338 = vdwg.mxu0
        %1340 = vrot.lane.b32.xlu0 %v1334, 8
        %v1341 = vpop.permute.xlu0 %1340
        %1343 = vst.msk [vmem:[#allocation2] sm:$0xff] %vm662, %v1341
        %1344 = vrot.lane.b32.xlu0 %v1118, 112
        %v1345 = vpop.permute.xlu0 %1344
        %1346 = vrot.lane.b32.xlu0 %v1119, 112
        %v1347 = vpop.permute.xlu0 %1346
        %v1349 = vsel %vm439, %v1345, 0
        %v1352 = vsel %vm439, %v1347, 0
        %1354 = vmatprep.subr.bf16.mxu0 0
        %1355 = vmatpush1.bf16.xpose.msra.mxu0 0
        %1356 = vmatprep.subr.bf16.mxu0 0
        %1357 = vmatpush1.bf16.xpose.msra.mxu0 0
        %1358 = vmatprep.subr.bf16.mxu0 0
        %1359 = vmatpush1.bf16.xpose.msra.mxu0 0
        %1360 = vmatprep.subr.bf16.mxu0 0
        %1361 = vmatpush1.bf16.xpose.msra.mxu0 0
        %1362 = vmatprep.subr.bf16.mxu0 0
        %1363 = vmatpush1.bf16.xpose.msra.mxu0 0
        %1364 = vmatprep.subr.bf16.mxu0 0
        %1365 = vmatpush1.bf16.xpose.msra.mxu0 0
        %1366 = vmatprep.subr.bf16.mxu0 0
        %1367 = vmatpush1.bf16.xpose.msra.mxu0 0
        %1368 = vmatprep.subr.bf16.mxu0 0
        %1369 = vmatpush1.bf16.xpose.msra.mxu0 %v1352
        %1370 = vmatprep.subr.bf16.mxu0 0
        %1371 = vmatpush2.bf16.xpose.msra.mxu0 0
        %1372 = vmatprep.subr.bf16.mxu0 0
        %1373 = vmatpush2.bf16.xpose.msra.mxu0 0
        %1374 = vmatprep.subr.bf16.mxu0 0
        %1375 = vmatpush2.bf16.xpose.msra.mxu0 0
        %1376 = vmatprep.subr.bf16.mxu0 0
        %1377 = vmatpush2.bf16.xpose.msra.mxu0 0
        %1378 = vmatprep.subr.bf16.mxu0 0
        %1379 = vmatpush2.bf16.xpose.msra.mxu0 0
        %1380 = vmatprep.subr.bf16.mxu0 0
        %1381 = vmatpush2.bf16.xpose.msra.mxu0 0
        %1382 = vmatprep.subr.bf16.mxu0 0
        %1383 = vmatpush2.bf16.xpose.msra.mxu0 0
        %1384 = vmatprep.subr.bf16.mxu0 0
        %1385 = vmatpush2.bf16.xpose.msra.mxu0 0
        %1386 = vmatprep.mubr.bf16.mxu0 0
        %1387 = vmatmul.mubr.bf16.gmra.mxu0 %v1349
        %v1388 = vpop.f32.mrf.mxu0
        %v1389 = vadd.f32 %v280, %v1388
        %v1390 = vpop.f32.mrf.mxu0
        %v1391 = vpop.f32.mrf.mxu0
        %v1392 = vpop.f32.mrf.mxu0
        %1393 = vdwg.mxu0
        %v1394 = vsel %vm439, %v1389, -inf
        %1395 = vmax.xlane.f32.xlu0 %v1394
        %v1396 = vpop.xlane.xlu0 %1395
        %v1397 = vsub.f32 %v1389, %v1396
        %v1398 = vmul.f32 %v1397, 1.442695
        %v1399 = vpow.pop %v1398
        %v1400 = vsel %vm439, %v1399, 0.0
        %1401 = vadd.xlane.f32.xlu0 %v1400
        %v1402 = vpop.xlane.xlu0 %1401
        %v1403 = vrcp.pop %v1402
        %v1404 = vmul.f32 %v1399, %v1403
        %v1405 = vpack.c.bf16 %v1404, %v1404
        %1406 = vrot.lane.b32.xlu0 %v1119, 80
        %v1407 = vpop.permute.xlu0 %1406
        %v1409 = vsel %vm439, %v1405, 0
        %v1412 = vsel %vm503, %v1407, 0
        %1414 = vmatprep.subr.bf16.mxu0 0
        %1415 = vmatpush1.bf16.msra.mxu0 0
        %1416 = vmatprep.subr.bf16.mxu0 0
        %1417 = vmatpush1.bf16.msra.mxu0 0
        %1418 = vmatprep.subr.bf16.mxu0 0
        %1419 = vmatpush1.bf16.msra.mxu0 0
        %1420 = vmatprep.subr.bf16.mxu0 0
        %1421 = vmatpush1.bf16.msra.mxu0 0
        %1422 = vmatprep.subr.bf16.mxu0 0
        %1423 = vmatpush1.bf16.msra.mxu0 0
        %1424 = vmatprep.subr.bf16.mxu0 0
        %1425 = vmatpush1.bf16.msra.mxu0 0
        %1426 = vmatprep.subr.bf16.mxu0 0
        %1427 = vmatpush1.bf16.msra.mxu0 0
        %1428 = vmatprep.subr.bf16.mxu0 0
        %1429 = vmatpush1.bf16.msra.mxu0 %v1412
        %1430 = vmatprep.subr.bf16.mxu0 0
        %1431 = vmatpush2.bf16.msra.mxu0 0
        %1432 = vmatprep.subr.bf16.mxu0 0
        %1433 = vmatpush2.bf16.msra.mxu0 0
        %1434 = vmatprep.subr.bf16.mxu0 0
        %1435 = vmatpush2.bf16.msra.mxu0 0
        %1436 = vmatprep.subr.bf16.mxu0 0
        %1437 = vmatpush2.bf16.msra.mxu0 0
        %1438 = vmatprep.subr.bf16.mxu0 0
        %1439 = vmatpush2.bf16.msra.mxu0 0
        %1440 = vmatprep.subr.bf16.mxu0 0
        %1441 = vmatpush2.bf16.msra.mxu0 0
        %1442 = vmatprep.subr.bf16.mxu0 0
        %1443 = vmatpush2.bf16.msra.mxu0 0
        %1444 = vmatprep.subr.bf16.mxu0 0
        %1445 = vmatpush2.bf16.msra.mxu0 0
        %1446 = vmatprep.mubr.bf16.mxu0 0
        %1447 = vmatmul.mubr.bf16.gmra.mxu0 %v1409
        %v1448 = vpop.f32.mrf.mxu0
        %v1449 = vadd.f32 0.0, %v1448
        %v1450 = vpop.f32.mrf.mxu0
        %v1451 = vpop.f32.mrf.mxu0
        %v1452 = vpop.f32.mrf.mxu0
        %1453 = vdwg.mxu0
        %1455 = vrot.lane.b32.xlu0 %v1449, 16
        %v1456 = vpop.permute.xlu0 %1455
        %1458 = vst.msk [vmem:[#allocation2] sm:$0xff] %vm778, %v1456
        %1459 = vrot.lane.b32.xlu0 %v1118, 104
        %v1460 = vpop.permute.xlu0 %1459
        %1461 = vrot.lane.b32.xlu0 %v1119, 104
        %v1462 = vpop.permute.xlu0 %1461
        %v1464 = vsel %vm439, %v1460, 0
        %v1467 = vsel %vm439, %v1462, 0
        %1469 = vmatprep.subr.bf16.mxu0 0
        %1470 = vmatpush1.bf16.xpose.msra.mxu0 0
        %1471 = vmatprep.subr.bf16.mxu0 0
        %1472 = vmatpush1.bf16.xpose.msra.mxu0 0
        %1473 = vmatprep.subr.bf16.mxu0 0
        %1474 = vmatpush1.bf16.xpose.msra.mxu0 0
        %1475 = vmatprep.subr.bf16.mxu0 0
        %1476 = vmatpush1.bf16.xpose.msra.mxu0 0
        %1477 = vmatprep.subr.bf16.mxu0 0
        %1478 = vmatpush1.bf16.xpose.msra.mxu0 0
        %1479 = vmatprep.subr.bf16.mxu0 0
        %1480 = vmatpush1.bf16.xpose.msra.mxu0 0
        %1481 = vmatprep.subr.bf16.mxu0 0
        %1482 = vmatpush1.bf16.xpose.msra.mxu0 0
        %1483 = vmatprep.subr.bf16.mxu0 0
        %1484 = vmatpush1.bf16.xpose.msra.mxu0 %v1467
        %1485 = vmatprep.subr.bf16.mxu0 0
        %1486 = vmatpush2.bf16.xpose.msra.mxu0 0
        %1487 = vmatprep.subr.bf16.mxu0 0
        %1488 = vmatpush2.bf16.xpose.msra.mxu0 0
        %1489 = vmatprep.subr.bf16.mxu0 0
        %1490 = vmatpush2.bf16.xpose.msra.mxu0 0
        %1491 = vmatprep.subr.bf16.mxu0 0
        %1492 = vmatpush2.bf16.xpose.msra.mxu0 0
        %1493 = vmatprep.subr.bf16.mxu0 0
        %1494 = vmatpush2.bf16.xpose.msra.mxu0 0
        %1495 = vmatprep.subr.bf16.mxu0 0
        %1496 = vmatpush2.bf16.xpose.msra.mxu0 0
        %1497 = vmatprep.subr.bf16.mxu0 0
        %1498 = vmatpush2.bf16.xpose.msra.mxu0 0
        %1499 = vmatprep.subr.bf16.mxu0 0
        %1500 = vmatpush2.bf16.xpose.msra.mxu0 0
        %1501 = vmatprep.mubr.bf16.mxu0 0
        %1502 = vmatmul.mubr.bf16.gmra.mxu0 %v1464
        %v1503 = vpop.f32.mrf.mxu0
        %v1504 = vadd.f32 %v280, %v1503
        %v1505 = vpop.f32.mrf.mxu0
        %v1506 = vpop.f32.mrf.mxu0
        %v1507 = vpop.f32.mrf.mxu0
        %1508 = vdwg.mxu0
        %v1509 = vsel %vm439, %v1504, -inf
        %1510 = vmax.xlane.f32.xlu0 %v1509
        %v1511 = vpop.xlane.xlu0 %1510
        %v1512 = vsub.f32 %v1504, %v1511
        %v1513 = vmul.f32 %v1512, 1.442695
        %v1514 = vpow.pop %v1513
        %v1515 = vsel %vm439, %v1514, 0.0
        %1516 = vadd.xlane.f32.xlu0 %v1515
        %v1517 = vpop.xlane.xlu0 %1516
        %v1518 = vrcp.pop %v1517
        %v1519 = vmul.f32 %v1514, %v1518
        %v1520 = vpack.c.bf16 %v1519, %v1519
        %1521 = vrot.lane.b32.xlu0 %v1119, 72
        %v1522 = vpop.permute.xlu0 %1521
        %v1524 = vsel %vm439, %v1520, 0
        %v1527 = vsel %vm503, %v1522, 0
        %1529 = vmatprep.subr.bf16.mxu0 0
        %1530 = vmatpush1.bf16.msra.mxu0 0
        %1531 = vmatprep.subr.bf16.mxu0 0
        %1532 = vmatpush1.bf16.msra.mxu0 0
        %1533 = vmatprep.subr.bf16.mxu0 0
        %1534 = vmatpush1.bf16.msra.mxu0 0
        %1535 = vmatprep.subr.bf16.mxu0 0
        %1536 = vmatpush1.bf16.msra.mxu0 0
        %1537 = vmatprep.subr.bf16.mxu0 0
        %1538 = vmatpush1.bf16.msra.mxu0 0
        %1539 = vmatprep.subr.bf16.mxu0 0
        %1540 = vmatpush1.bf16.msra.mxu0 0
        %1541 = vmatprep.subr.bf16.mxu0 0
        %1542 = vmatpush1.bf16.msra.mxu0 0
        %1543 = vmatprep.subr.bf16.mxu0 0
        %1544 = vmatpush1.bf16.msra.mxu0 %v1527
        %1545 = vmatprep.subr.bf16.mxu0 0
        %1546 = vmatpush2.bf16.msra.mxu0 0
        %1547 = vmatprep.subr.bf16.mxu0 0
        %1548 = vmatpush2.bf16.msra.mxu0 0
        %1549 = vmatprep.subr.bf16.mxu0 0
        %1550 = vmatpush2.bf16.msra.mxu0 0
        %1551 = vmatprep.subr.bf16.mxu0 0
        %1552 = vmatpush2.bf16.msra.mxu0 0
        %1553 = vmatprep.subr.bf16.mxu0 0
        %1554 = vmatpush2.bf16.msra.mxu0 0
        %1555 = vmatprep.subr.bf16.mxu0 0
        %1556 = vmatpush2.bf16.msra.mxu0 0
        %1557 = vmatprep.subr.bf16.mxu0 0
        %1558 = vmatpush2.bf16.msra.mxu0 0
        %1559 = vmatprep.subr.bf16.mxu0 0
        %1560 = vmatpush2.bf16.msra.mxu0 0
        %1561 = vmatprep.mubr.bf16.mxu0 0
        %1562 = vmatmul.mubr.bf16.gmra.mxu0 %v1524
        %v1563 = vpop.f32.mrf.mxu0
        %v1564 = vadd.f32 0.0, %v1563
        %v1565 = vpop.f32.mrf.mxu0
        %v1566 = vpop.f32.mrf.mxu0
        %v1567 = vpop.f32.mrf.mxu0
        %1568 = vdwg.mxu0
        %1570 = vrot.lane.b32.xlu0 %v1564, 24
        %v1571 = vpop.permute.xlu0 %1570
        %1573 = vst.msk [vmem:[#allocation2] sm:$0xff] %vm894, %v1571
        %v1574 = vld [vmem:[#allocation2] sm:$0xff]
        %v1575 = vpack.c.bf16 %v1574, %v1574
        %v1576 = vlaneseq
        %v1577 = vshrl.u32 %v1576, 7
        %v1578 = vsub.s32 0, %v1577
        %v1579 = vrot.slane %v272, %v1578
        %v1584 = vunpack.c.l.b16 %v256
        %v1585 = vunpack.c.l.b16 %v257
        %v1586 = vunpack.c.l.b16 %v258
        %v1587 = vunpack.c.l.b16 %v259
        %v1588 = vpack.c.b16 %v1585, %v1584
        %v1589 = vpack.c.b16 %v1587, %v1586
        %v1593 = vsel %vm391, %v1575, 0
        %1595 = vmatprep.subr.bf16.mxu0 0
        %1596 = vmatpush1.bf16.msra.mxu0 0
        %1597 = vmatprep.subr.bf16.mxu0 0
        %1598 = vmatpush1.bf16.msra.mxu0 0
        %1599 = vmatprep.subr.bf16.mxu0 0
        %1600 = vmatpush1.bf16.msra.mxu0 0
        %1601 = vmatprep.subr.bf16.mxu0 0
        %1602 = vmatpush1.bf16.msra.mxu0 0
        %1603 = vmatprep.subr.bf16.mxu0 0
        %1604 = vmatpush1.bf16.msra.mxu0 0
        %1605 = vmatprep.subr.bf16.mxu0 0
        %1606 = vmatpush1.bf16.msra.mxu0 0
        %1607 = vmatprep.subr.bf16.mxu0 0
        %1608 = vmatpush1.bf16.msra.mxu0 %v1589
        %1609 = vmatprep.subr.bf16.mxu0 0
        %1610 = vmatpush1.bf16.msra.mxu0 %v1588
        %1611 = vmatprep.subr.bf16.mxu0 0
        %1612 = vmatpush2.bf16.msra.mxu0 0
        %1613 = vmatprep.subr.bf16.mxu0 0
        %1614 = vmatpush2.bf16.msra.mxu0 0
        %1615 = vmatprep.subr.bf16.mxu0 0
        %1616 = vmatpush2.bf16.msra.mxu0 0
        %1617 = vmatprep.subr.bf16.mxu0 0
        %1618 = vmatpush2.bf16.msra.mxu0 0
        %1619 = vmatprep.subr.bf16.mxu0 0
        %1620 = vmatpush2.bf16.msra.mxu0 0
        %1621 = vmatprep.subr.bf16.mxu0 0
        %1622 = vmatpush2.bf16.msra.mxu0 0
        %1623 = vmatprep.subr.bf16.mxu0 0
        %1624 = vmatpush2.bf16.msra.mxu0 0
        %1625 = vmatprep.subr.bf16.mxu0 0
        %1626 = vmatpush2.bf16.msra.mxu0 0
        %1627 = vmatprep.mubr.bf16.mxu0 0
        %1628 = vmatmul.mubr.bf16.gmra.mxu0 %v1593
        %v1629 = vpop.f32.mrf.mxu0
        %v1630 = vadd.f32 %v1579, %v1629
        %v1631 = vpop.f32.mrf.mxu0
        %v1632 = vpop.f32.mrf.mxu0
        %v1633 = vpop.f32.mrf.mxu0
        %1634 = vdwg.mxu0
        %v1635 = vadd.f32 %v981, %v1630
        %v1636 = vpack.c.bf16 %v1635, %v1635
        %v1637 = vlaneseq
        %v1638 = vshrl.u32 %v1637, 7
        %v1639 = vsub.s32 0, %v1638
        %v1640 = vrot.slane %v273, %v1639
        %v1645 = vunpack.c.l.b16 %v260
        %v1646 = vunpack.c.l.b16 %v261
        %v1647 = vunpack.c.l.b16 %v262
        %v1648 = vunpack.c.l.b16 %v263
        %v1649 = vpack.c.b16 %v1646, %v1645
        %v1650 = vpack.c.b16 %v1648, %v1647
        %v1654 = vsel %vm391, %v1636, 0
        %1656 = vmatprep.subr.bf16.mxu0 0
        %1657 = vmatpush1.bf16.msra.mxu0 0
        %1658 = vmatprep.subr.bf16.mxu0 0
        %1659 = vmatpush1.bf16.msra.mxu0 0
        %1660 = vmatprep.subr.bf16.mxu0 0
        %1661 = vmatpush1.bf16.msra.mxu0 0
        %1662 = vmatprep.subr.bf16.mxu0 0
        %1663 = vmatpush1.bf16.msra.mxu0 0
        %1664 = vmatprep.subr.bf16.mxu0 0
        %1665 = vmatpush1.bf16.msra.mxu0 0
        %1666 = vmatprep.subr.bf16.mxu0 0
        %1667 = vmatpush1.bf16.msra.mxu0 0
        %1668 = vmatprep.subr.bf16.mxu0 0
        %1669 = vmatpush1.bf16.msra.mxu0 %v1650
        %1670 = vmatprep.subr.bf16.mxu0 0
        %1671 = vmatpush1.bf16.msra.mxu0 %v1649
        %1672 = vmatprep.subr.bf16.mxu0 0
        %1673 = vmatpush2.bf16.msra.mxu0 0
        %1674 = vmatprep.subr.bf16.mxu0 0
        %1675 = vmatpush2.bf16.msra.mxu0 0
        %1676 = vmatprep.subr.bf16.mxu0 0
        %1677 = vmatpush2.bf16.msra.mxu0 0
        %1678 = vmatprep.subr.bf16.mxu0 0
        %1679 = vmatpush2.bf16.msra.mxu0 0
        %1680 = vmatprep.subr.bf16.mxu0 0
        %1681 = vmatpush2.bf16.msra.mxu0 0
        %1682 = vmatprep.subr.bf16.mxu0 0
        %1683 = vmatpush2.bf16.msra.mxu0 0
        %1684 = vmatprep.subr.bf16.mxu0 0
        %1685 = vmatpush2.bf16.msra.mxu0 0
        %1686 = vmatprep.subr.bf16.mxu0 0
        %1687 = vmatpush2.bf16.msra.mxu0 0
        %1688 = vmatprep.mubr.bf16.mxu0 0
        %1689 = vmatmul.mubr.bf16.gmra.mxu0 %v1654
        %v1690 = vpop.f32.mrf.mxu0
        %v1691 = vadd.f32 %v1640, %v1690
        %v1692 = vpop.f32.mrf.mxu0
        %v1693 = vpop.f32.mrf.mxu0
        %v1694 = vpop.f32.mrf.mxu0
        %1695 = vdwg.mxu0
        %v1696 = vmax.f32 %v1691, 0.0
        %v1697 = vpack.c.bf16 %v1696, %v1696
        %v1698 = vlaneseq
        %v1699 = vshrl.u32 %v1698, 7
        %v1700 = vsub.s32 0, %v1699
        %v1701 = vrot.slane %v274, %v1700
        %v1706 = vunpack.c.l.b16 %v264
        %v1707 = vunpack.c.l.b16 %v265
        %v1708 = vunpack.c.l.b16 %v266
        %v1709 = vunpack.c.l.b16 %v267
        %v1710 = vpack.c.b16 %v1707, %v1706
        %v1711 = vpack.c.b16 %v1709, %v1708
        %v1715 = vsel %vm391, %v1697, 0
        %1717 = vmatprep.subr.bf16.mxu0 0
        %1718 = vmatpush1.bf16.msra.mxu0 0
        %1719 = vmatprep.subr.bf16.mxu0 0
        %1720 = vmatpush1.bf16.msra.mxu0 0
        %1721 = vmatprep.subr.bf16.mxu0 0
        %1722 = vmatpush1.bf16.msra.mxu0 0
        %1723 = vmatprep.subr.bf16.mxu0 0
        %1724 = vmatpush1.bf16.msra.mxu0 0
        %1725 = vmatprep.subr.bf16.mxu0 0
        %1726 = vmatpush1.bf16.msra.mxu0 0
        %1727 = vmatprep.subr.bf16.mxu0 0
        %1728 = vmatpush1.bf16.msra.mxu0 0
        %1729 = vmatprep.subr.bf16.mxu0 0
        %1730 = vmatpush1.bf16.msra.mxu0 %v1711
        %1731 = vmatprep.subr.bf16.mxu0 0
        %1732 = vmatpush1.bf16.msra.mxu0 %v1710
        %1733 = vmatprep.subr.bf16.mxu0 0
        %1734 = vmatpush2.bf16.msra.mxu0 0
        %1735 = vmatprep.subr.bf16.mxu0 0
        %1736 = vmatpush2.bf16.msra.mxu0 0
        %1737 = vmatprep.subr.bf16.mxu0 0
        %1738 = vmatpush2.bf16.msra.mxu0 0
        %1739 = vmatprep.subr.bf16.mxu0 0
        %1740 = vmatpush2.bf16.msra.mxu0 0
        %1741 = vmatprep.subr.bf16.mxu0 0
        %1742 = vmatpush2.bf16.msra.mxu0 0
        %1743 = vmatprep.subr.bf16.mxu0 0
        %1744 = vmatpush2.bf16.msra.mxu0 0
        %1745 = vmatprep.subr.bf16.mxu0 0
        %1746 = vmatpush2.bf16.msra.mxu0 0
        %1747 = vmatprep.subr.bf16.mxu0 0
        %1748 = vmatpush2.bf16.msra.mxu0 0
        %1749 = vmatprep.mubr.bf16.mxu0 0
        %1750 = vmatmul.mubr.bf16.gmra.mxu0 %v1715
        %v1751 = vpop.f32.mrf.mxu0
        %v1752 = vadd.f32 %v1701, %v1751
        %v1753 = vpop.f32.mrf.mxu0
        %v1754 = vpop.f32.mrf.mxu0
        %v1755 = vpop.f32.mrf.mxu0
        %1756 = vdwg.mxu0
        %v1757 = vadd.f32 %v1635, %v1752
        %v1758 = vsel %vm391, %v1757, 0.0
        %1759 = vadd.xlane.f32.xlu0 %v1758
        %v1760 = vpop.xlane.xlu0 %1759
        %v1761 = vmul.f32 %v1760, %v961
        %v1762 = vsub.f32 %v1757, %v1761
        %v1763 = vmul.f32 %v1762, %v1762
        %v1764 = vsel %vm391, %v1763, 0.0
        %1765 = vadd.xlane.f32.xlu0 %v1764
        %v1766 = vpop.xlane.xlu0 %1765
        %v1767 = vmul.f32 %v1766, %v961
        %v1768 = vadd.f32 %v1767, 1e-05
        %v1769 = vrsqrt.pop %v1768
        %v1770 = vmul.f32 %v1762, %v1769
        %v1771 = vlaneseq
        %v1772 = vshrl.u32 %v1771, 7
        %v1773 = vsub.s32 0, %v1772
        %v1774 = vrot.slane %v277, %v1773
        %v1775 = vmul.f32 %v1770, %v1774
        %v1776 = vlaneseq
        %v1777 = vshrl.u32 %v1776, 7
        %v1778 = vsub.s32 0, %v1777
        %v1779 = vrot.slane %v278, %v1778
        %v1780 = vadd.f32 %v1775, %v1779
        %1781 = vst.msk [vmem:[%s228] sm:$0xff] %vm391, %v1780
        %s1782 = sand.u32 %s142, 1
        %s1783 = scalar_lea.sflag [#allocation4], %s1782
        %s1784 = sand.u32 %s142, 1
        %s1785 = smul.addr %s1784, 8
        %s1786 = scalar_lea.vmem [#allocation3], %s1785
        // Predicated region
        $region41: #{tpu_custom_call.1} parent=39 // pred_check
          %p1787 = pneg %p152
        $region42: #{tpu_custom_call.1} parent=39 // pred_check_branch
          %1789 = sbr.rel (%p1787) target = $region44
        $region43: #{tpu_custom_call.1} parent=39 // pred_region
          %s1791 = ssub.s32 128, 128
          %1792 = vsyncadd %s1783, %s1791
          %s1793 = smul.addr %s19, 128
          %s1794 = scalar_lea.hbm %s5, %s1793
          %s1796 = sshll.u32 %s1786, 4
          %s1797 = int_to_ptr.vmem [resolvable:$true] %s1796
          %1799 = dma.vmem_to_hbm [thread:$0]  %s1797, 128, %s1794, %s1783
        $region44: #{tpu_custom_call.1} parent=39 // pred_fallthru
          _
      $region40: #{tpu_custom_call.1} parent=5 // pred_fallthru
        _
      %p1800 = scmp.le.s32.totalorder 2, %s14
      // Predicated region
      $region45: #{tpu_custom_call.1} parent=5 // pred_check
        %p1801 = pneg %p1800
      $region46: #{tpu_custom_call.1} parent=5 // pred_check_branch
        %1803 = sbr.rel (%p1801) target = $region48
      $region47: #{tpu_custom_call.1} parent=5 // pred_region
        %s1804 = ssub.s32 %s14, 2
        // Predicated region
        $region49: #{tpu_custom_call.1} parent=47 // pred_check
          %p1805 = pneg %p158
        $region50: #{tpu_custom_call.1} parent=47 // pred_check_branch
          %1807 = sbr.rel (%p1805) target = $region52
        $region51: #{tpu_custom_call.1} parent=47 // pred_region
          %s1808 = sand.u32 %s143, 1
          %s1809 = scalar_lea.sflag [#allocation4], %s1808
          %s1810 = sand.u32 %s143, 1
          %s1811 = smul.addr %s1810, 8
          %s1812 = scalar_lea.vmem [#allocation3], %s1811
          %1813 = dma.done %s1809, 128
        $region52: #{tpu_custom_call.1} parent=47 // pred_fallthru
          _
      $region48: #{tpu_custom_call.1} parent=5 // pred_fallthru
        _
    $region6: #{tpu_custom_call.1} parent=1 // loop_footer
      %s18 = sadd.s32 1, %s14
    $region7: #{tpu_custom_call.1} parent=1 // loop_footer_branch
      %13 = sbr.rel target = $region3
    $region8: #{tpu_custom_call.1} parent=1 // loop_exit
      _
    %1814 = vsyncpa [#allocation4], 1
    %s1815 = scalar_lea.sflag [#allocation4], 1
    %1816 = vsyncpa %s1815, 1

</llo_original>
